<compile_context>
chip_gen: v7x
topology: tpu7x:2x2x1
jax: 0.10.0
libtpu: 0.0.40
codegen_flags: <defaults>
</compile_context>

<pallas_src>
import functools

import jax
import jax.numpy as jnp
from jax.experimental import pallas as pl
from jax.experimental.pallas import tpu as pltpu


def _lstm_kernel(*refs, T, num_layers, hidden, block_b, input_size):
    # refs = (x_ref,
    #         w_ih_0, w_hh_0, b_0, ..., w_ih_{L-1}, w_hh_{L-1}, b_{L-1},
    #         wfc_ref, bfc_ref,
    #         out_ref, hseq_ref)
    x_ref = refs[0]
    layer_refs = refs[1:1 + 3 * num_layers]
    wfc_ref, bfc_ref, out_ref, hseq_ref = refs[1 + 3 * num_layers:]

    B = block_b
    H = hidden

    h_last = None
    for l in range(num_layers):
        # Per-layer weight loads (not hoisted for all layers at once) so the
        # vreg working set stays bounded if H / num_layers grow.
        w_ih = layer_refs[3 * l][...]        # (in_l, 4H)
        w_hh = layer_refs[3 * l + 1][...]    # (H,   4H)
        bias = layer_refs[3 * l + 2][...]    # (1,   4H)

        if l == 0:
            in_seq = x_ref[...].reshape(T * B, input_size)   # (T*B, I)
        else:
            in_seq = hseq_ref[...]                           # (T*B, H)

        # Whole-layer input projection as ONE batched MXU GEMM (M = T*B),
        # bias folded in here -> neither sits on the serial recurrence.
        xproj = (jnp.dot(in_seq, w_ih, preferred_element_type=jnp.float32)
                 + bias)                                     # (T*B, 4H)

        h = jnp.zeros((B, H), jnp.float32)
        c = jnp.zeros((B, H), jnp.float32)

        # Serial recurrence: only h @ W_hh (+ elementwise) per step.
        # T is small -> fully unrolled with static slices; for large T switch
        # to lax.fori_loop with a capped unroll and dynamic xproj slicing.
        for t in range(T):
            gates = xproj[t * B:(t + 1) * B, :] + jnp.dot(
                h, w_hh, preferred_element_type=jnp.float32)  # (B, 4H)
            sig = jax.nn.sigmoid(gates)
            i_g = sig[:, 0 * H:1 * H]
            f_g = sig[:, 1 * H:2 * H]
            o_g = sig[:, 3 * H:4 * H]
            g_g = jnp.tanh(gates[:, 2 * H:3 * H])   # tanh only on the g quarter
            c = f_g * c + i_g * g_g
            h = o_g * jnp.tanh(c)
            if l < num_layers - 1:
                hseq_ref[t * B:(t + 1) * B, :] = h
        h_last = h

    # Final Linear on the last timestep's hidden state.
    # TODO(synk): O=50 is a sub-128-lane masked store; pad O to 128 in the
    # wrapper (slice after) if the output slab ever becomes large.
    out_ref[...] = (jnp.dot(h_last, wfc_ref[...],
                            preferred_element_type=jnp.float32)
                    + bfc_ref[...]).astype(out_ref.dtype)


def lstm_regressor_forward(x, params, *, block_b=8):
    """x: (B, T, I) float32, batch_first — same contract as the PyTorch module."""
    B, T, I = x.shape
    num_layers = len(params["layers"])
    H = params["layers"][0]["w_hh"].shape[0]
    O = params["wfc"].shape[1]

    # Pad batch to a multiple of the batch block (8 f32 sublanes); padded rows
    # are independent and sliced away at the end.
    B_pad = max(block_b, ((B + block_b - 1) // block_b) * block_b)
    if B_pad != B:
        x = jnp.pad(x, ((0, B_pad - B), (0, 0), (0, 0)))

    # Time-major layout so the kernel reads contiguous (T, BB, I) slabs.
    # TODO(synk): at scale, produce x time-major upstream to avoid this extra
    # HBM read+write of x.
    x_tbi = jnp.transpose(x, (1, 0, 2))        # (T, B_pad, I)

    flat_weights = []
    in_specs = [pl.BlockSpec((T, block_b, I), lambda b: (0, b, 0))]
    for layer in params["layers"]:
        for w in (layer["w_ih"], layer["w_hh"], layer["b"]):
            flat_weights.append(w)
            in_specs.append(pl.BlockSpec(w.shape, lambda b: (0, 0)))
    for w in (params["wfc"], params["bfc"]):
        flat_weights.append(w)
        in_specs.append(pl.BlockSpec(w.shape, lambda b: (0, 0)))

    kernel = functools.partial(_lstm_kernel, T=T, num_layers=num_layers,
                               hidden=H, block_b=block_b, input_size=I)

    out = pl.pallas_call(
        kernel,
        out_shape=jax.ShapeDtypeStruct((B_pad, O), jnp.float32),
        grid=(B_pad // block_b,),
        in_specs=in_specs,
        out_specs=pl.BlockSpec((block_b, O), lambda b: (b, 0)),
        scratch_shapes=[pltpu.VMEM((T * block_b, H), jnp.float32)],
        compiler_params=pltpu.CompilerParams(
            dimension_semantics=("parallel",)),
    )(x_tbi, *flat_weights)
    return out[:B]


def make_params(key, input_size, hidden_size, num_layers, output_size):
    """PyTorch-style init (U[-1/sqrt(H), 1/sqrt(H)]).  Per layer: W_ih (in_l,4H)
    and W_hh (H,4H) kept separate (pre-transposed); biases summed into one
    (1,4H) row.  Gate order i, f, g, o."""
    H = hidden_size
    bound = 1.0 / float(H) ** 0.5
    ks = jax.random.split(key, 4 * num_layers + 2)
    u = lambda k, shape: jax.random.uniform(k, shape, jnp.float32,
                                            minval=-bound, maxval=bound)
    layers = []
    ki = 0
    in_l = input_size
    for _ in range(num_layers):
        w_ih = u(ks[ki], (in_l, 4 * H)); ki += 1
        w_hh = u(ks[ki], (H, 4 * H)); ki += 1
        b_ih = u(ks[ki], (1, 4 * H)); ki += 1
        b_hh = u(ks[ki], (1, 4 * H)); ki += 1
        layers.append({"w_ih": w_ih, "w_hh": w_hh, "b": b_ih + b_hh})
        in_l = H
    wfc = u(ks[ki], (H, output_size)); ki += 1
    bfc = u(ks[ki], (1, output_size))
    return {"layers": layers, "wfc": wfc, "bfc": bfc}


def reference_forward(x, params):
    """Pure-JAX reference (lax.scan) for correctness checking."""
    B = x.shape[0]
    H = params["layers"][0]["w_hh"].shape[0]

    seq = jnp.transpose(x, (1, 0, 2))  # time-major
    h_last = None
    for layer in params["layers"]:
        w_ih, w_hh, b = layer["w_ih"], layer["w_hh"], layer["b"]

        def cell(carry, xt, w_ih=w_ih, w_hh=w_hh, b=b):
            h, c = carry
            g = (jnp.dot(xt, w_ih, preferred_element_type=jnp.float32)
                 + jnp.dot(h, w_hh, preferred_element_type=jnp.float32) + b)
            i = jax.nn.sigmoid(g[:, 0 * H:1 * H])
            f = jax.nn.sigmoid(g[:, 1 * H:2 * H])
            gg = jnp.tanh(g[:, 2 * H:3 * H])
            o = jax.nn.sigmoid(g[:, 3 * H:4 * H])
            c = f * c + i * gg
            h = o * jnp.tanh(c)
            return (h, c), h

        (h_last, _), seq = jax.lax.scan(
            cell, (jnp.zeros((B, H), jnp.float32),
                   jnp.zeros((B, H), jnp.float32)), seq)
    return (jnp.dot(h_last, params["wfc"], preferred_element_type=jnp.float32)
            + params["bfc"])


if __name__ == "__main__":
    B, T, I = 4, 8, 16
    H, num_layers, O = 32, 2, 50   # LSTMRegressor(input_size=16, hidden=32, layers=2)

    key = jax.random.PRNGKey(0)
    kx, kp = jax.random.split(key)
    x = jax.random.normal(kx, (B, T, I), jnp.float32)
    params = make_params(kp, I, H, num_layers, O)

    out = lstm_regressor_forward(x, params)
    jax.block_until_ready(out)

    ref = reference_forward(x, params)
    assert out.shape == (B, O)
    assert jnp.allclose(out, ref, atol=1e-4, rtol=1e-4), "mismatch vs reference"
    print("KERNEL_OK")
</pallas_src>

<mosaic_0001>
module attributes {stable_mosaic.version = 11 : i64} {
  func.func @_lstm_kernel(%arg0: i32, %arg1: memref<8x8x16xf32, #tpu.memory_space<vmem>>, %arg2: memref<16x128xf32, #tpu.memory_space<vmem>>, %arg3: memref<32x128xf32, #tpu.memory_space<vmem>>, %arg4: memref<1x128xf32, #tpu.memory_space<vmem>>, %arg5: memref<32x128xf32, #tpu.memory_space<vmem>>, %arg6: memref<32x128xf32, #tpu.memory_space<vmem>>, %arg7: memref<1x128xf32, #tpu.memory_space<vmem>>, %arg8: memref<32x50xf32, #tpu.memory_space<vmem>>, %arg9: memref<1x50xf32, #tpu.memory_space<vmem>>, %arg10: memref<8x50xf32, #tpu.memory_space<vmem>>, %arg11: memref<64x32xf32, #tpu.memory_space<vmem>>) attributes {dimension_semantics = [#tpu.dimension_semantics<parallel>], iteration_bounds = array<i64: 1>, scalar_prefetch = 0 : i64, scratch_operands = 1 : i64, tpu.core_type = #tpu.core_type<tc>, window_params = [{transform_indices = @transform_0, window_bounds = array<i64: 8, 8, 16>}, {pipeline_mode = #tpu.pipeline_mode<synchronous>, transform_indices = @transform_1, window_bounds = array<i64: 16, 128>}, {pipeline_mode = #tpu.pipeline_mode<synchronous>, transform_indices = @transform_2, window_bounds = array<i64: 32, 128>}, {pipeline_mode = #tpu.pipeline_mode<synchronous>, transform_indices = @transform_3, window_bounds = array<i64: 1, 128>}, {pipeline_mode = #tpu.pipeline_mode<synchronous>, transform_indices = @transform_4, window_bounds = array<i64: 32, 128>}, {pipeline_mode = #tpu.pipeline_mode<synchronous>, transform_indices = @transform_5, window_bounds = array<i64: 32, 128>}, {pipeline_mode = #tpu.pipeline_mode<synchronous>, transform_indices = @transform_6, window_bounds = array<i64: 1, 128>}, {pipeline_mode = #tpu.pipeline_mode<synchronous>, transform_indices = @transform_7, window_bounds = array<i64: 32, 50>}, {pipeline_mode = #tpu.pipeline_mode<synchronous>, transform_indices = @transform_8, window_bounds = array<i64: 1, 50>}, {transform_indices = @transform_9, window_bounds = array<i64: 8, 50>}]} {
    %c0 = arith.constant 0 : index
    %c0_0 = arith.constant 0 : index
    %0 = vector.load %arg2[%c0, %c0_0] : memref<16x128xf32, #tpu.memory_space<vmem>>, vector<16x128xf32>
    %c0_1 = arith.constant 0 : index
    %c0_2 = arith.constant 0 : index
    %1 = vector.load %arg3[%c0_1, %c0_2] : memref<32x128xf32, #tpu.memory_space<vmem>>, vector<32x128xf32>
    %c0_3 = arith.constant 0 : index
    %c0_4 = arith.constant 0 : index
    %2 = vector.load %arg4[%c0_3, %c0_4] : memref<1x128xf32, #tpu.memory_space<vmem>>, vector<1x128xf32>
    %c0_5 = arith.constant 0 : index
    %c0_6 = arith.constant 0 : index
    %c0_7 = arith.constant 0 : index
    %3 = vector.load %arg1[%c0_5, %c0_6, %c0_7] : memref<8x8x16xf32, #tpu.memory_space<vmem>>, vector<8x8x16xf32>
    %4 = vector.shape_cast %3 : vector<8x8x16xf32> to vector<64x16xf32>
    %cst = arith.constant dense<0.000000e+00> : vector<64x128xf32>
    %5 = tpu.matmul %4, %0, %cst {dimension_numbers = #tpu.dot_dimension_numbers<[1], [0], [0], [1], [0, 0, 1, 1], [], []>} : vector<64x16xf32>, vector<16x128xf32>, vector<64x128xf32> -> vector<64x128xf32>
    %6 = vector.broadcast %2 : vector<1x128xf32> to vector<64x128xf32>
    %7 = arith.addf %5, %6 : vector<64x128xf32>
    %cst_8 = arith.constant 0.000000e+00 : f32
    %8 = vector.broadcast %cst_8 : f32 to vector<8x32xf32>
    %cst_9 = arith.constant 0.000000e+00 : f32
    %9 = vector.broadcast %cst_9 : f32 to vector<8x32xf32>
    %10 = vector.extract_strided_slice %7 {offsets = [0, 0], sizes = [8, 128], strides = [1, 1]} : vector<64x128xf32> to vector<8x128xf32>
    %cst_10 = arith.constant dense<0.000000e+00> : vector<8x128xf32>
    %11 = tpu.matmul %8, %1, %cst_10 {dimension_numbers = #tpu.dot_dimension_numbers<[1], [0], [0], [1], [0, 0, 1, 1], [], []>} : vector<8x32xf32>, vector<32x128xf32>, vector<8x128xf32> -> vector<8x128xf32>
    %12 = arith.addf %10, %11 : vector<8x128xf32>
    %13 = arith.negf %12 : vector<8x128xf32>
    %14 = math.exp %13 : vector<8x128xf32>
    %cst_11 = arith.constant 1.000000e+00 : f32
    %15 = vector.broadcast %cst_11 : f32 to vector<8x128xf32>
    %16 = arith.addf %15, %14 : vector<8x128xf32>
    %17 = arith.divf %15, %16 : vector<8x128xf32>
    %18 = vector.extract_strided_slice %17 {offsets = [0, 0], sizes = [8, 32], strides = [1, 1]} : vector<8x128xf32> to vector<8x32xf32>
    %19 = vector.extract_strided_slice %17 {offsets = [0, 32], sizes = [8, 32], strides = [1, 1]} : vector<8x128xf32> to vector<8x32xf32>
    %20 = vector.extract_strided_slice %17 {offsets = [0, 96], sizes = [8, 32], strides = [1, 1]} : vector<8x128xf32> to vector<8x32xf32>
    %21 = vector.extract_strided_slice %12 {offsets = [0, 64], sizes = [8, 32], strides = [1, 1]} : vector<8x128xf32> to vector<8x32xf32>
    %22 = math.tanh %21 : vector<8x32xf32>
    %23 = arith.mulf %19, %9 : vector<8x32xf32>
    %24 = arith.mulf %18, %22 : vector<8x32xf32>
    %25 = arith.addf %23, %24 : vector<8x32xf32>
    %26 = math.tanh %25 : vector<8x32xf32>
    %27 = arith.mulf %20, %26 : vector<8x32xf32>
    %c0_12 = arith.constant 0 : index
    %c0_13 = arith.constant 0 : index
    %28 = vector.load %arg11[%c0_12, %c0_13] : memref<64x32xf32, #tpu.memory_space<vmem>>, vector<8x32xf32>
    tpu.vector_store %arg11[%c0_12, %c0_13], %27 {strides = array<i32>} : memref<64x32xf32, #tpu.memory_space<vmem>>, vector<8x32xf32>,
    %29 = vector.extract_strided_slice %7 {offsets = [8, 0], sizes = [8, 128], strides = [1, 1]} : vector<64x128xf32> to vector<8x128xf32>
    %cst_14 = arith.constant dense<0.000000e+00> : vector<8x128xf32>
    %30 = tpu.matmul %27, %1, %cst_14 {dimension_numbers = #tpu.dot_dimension_numbers<[1], [0], [0], [1], [0, 0, 1, 1], [], []>} : vector<8x32xf32>, vector<32x128xf32>, vector<8x128xf32> -> vector<8x128xf32>
    %31 = arith.addf %29, %30 : vector<8x128xf32>
    %32 = arith.negf %31 : vector<8x128xf32>
    %33 = math.exp %32 : vector<8x128xf32>
    %cst_15 = arith.constant 1.000000e+00 : f32
    %34 = vector.broadcast %cst_15 : f32 to vector<8x128xf32>
    %35 = arith.addf %34, %33 : vector<8x128xf32>
    %36 = arith.divf %34, %35 : vector<8x128xf32>
    %37 = vector.extract_strided_slice %36 {offsets = [0, 0], sizes = [8, 32], strides = [1, 1]} : vector<8x128xf32> to vector<8x32xf32>
    %38 = vector.extract_strided_slice %36 {offsets = [0, 32], sizes = [8, 32], strides = [1, 1]} : vector<8x128xf32> to vector<8x32xf32>
    %39 = vector.extract_strided_slice %36 {offsets = [0, 96], sizes = [8, 32], strides = [1, 1]} : vector<8x128xf32> to vector<8x32xf32>
    %40 = vector.extract_strided_slice %31 {offsets = [0, 64], sizes = [8, 32], strides = [1, 1]} : vector<8x128xf32> to vector<8x32xf32>
    %41 = math.tanh %40 : vector<8x32xf32>
    %42 = arith.mulf %38, %25 : vector<8x32xf32>
    %43 = arith.mulf %37, %41 : vector<8x32xf32>
    %44 = arith.addf %42, %43 : vector<8x32xf32>
    %45 = math.tanh %44 : vector<8x32xf32>
    %46 = arith.mulf %39, %45 : vector<8x32xf32>
    %c8 = arith.constant 8 : index
    %c0_16 = arith.constant 0 : index
    %47 = vector.load %arg11[%c8, %c0_16] : memref<64x32xf32, #tpu.memory_space<vmem>>, vector<8x32xf32>
    tpu.vector_store %arg11[%c8, %c0_16], %46 {strides = array<i32>} : memref<64x32xf32, #tpu.memory_space<vmem>>, vector<8x32xf32>,
    %48 = vector.extract_strided_slice %7 {offsets = [16, 0], sizes = [8, 128], strides = [1, 1]} : vector<64x128xf32> to vector<8x128xf32>
    %cst_17 = arith.constant dense<0.000000e+00> : vector<8x128xf32>
    %49 = tpu.matmul %46, %1, %cst_17 {dimension_numbers = #tpu.dot_dimension_numbers<[1], [0], [0], [1], [0, 0, 1, 1], [], []>} : vector<8x32xf32>, vector<32x128xf32>, vector<8x128xf32> -> vector<8x128xf32>
    %50 = arith.addf %48, %49 : vector<8x128xf32>
    %51 = arith.negf %50 : vector<8x128xf32>
    %52 = math.exp %51 : vector<8x128xf32>
    %cst_18 = arith.constant 1.000000e+00 : f32
    %53 = vector.broadcast %cst_18 : f32 to vector<8x128xf32>
    %54 = arith.addf %53, %52 : vector<8x128xf32>
    %55 = arith.divf %53, %54 : vector<8x128xf32>
    %56 = vector.extract_strided_slice %55 {offsets = [0, 0], sizes = [8, 32], strides = [1, 1]} : vector<8x128xf32> to vector<8x32xf32>
    %57 = vector.extract_strided_slice %55 {offsets = [0, 32], sizes = [8, 32], strides = [1, 1]} : vector<8x128xf32> to vector<8x32xf32>
    %58 = vector.extract_strided_slice %55 {offsets = [0, 96], sizes = [8, 32], strides = [1, 1]} : vector<8x128xf32> to vector<8x32xf32>
    %59 = vector.extract_strided_slice %50 {offsets = [0, 64], sizes = [8, 32], strides = [1, 1]} : vector<8x128xf32> to vector<8x32xf32>
    %60 = math.tanh %59 : vector<8x32xf32>
    %61 = arith.mulf %57, %44 : vector<8x32xf32>
    %62 = arith.mulf %56, %60 : vector<8x32xf32>
    %63 = arith.addf %61, %62 : vector<8x32xf32>
    %64 = math.tanh %63 : vector<8x32xf32>
    %65 = arith.mulf %58, %64 : vector<8x32xf32>
    %c16 = arith.constant 16 : index
    %c0_19 = arith.constant 0 : index
    %66 = vector.load %arg11[%c16, %c0_19] : memref<64x32xf32, #tpu.memory_space<vmem>>, vector<8x32xf32>
    tpu.vector_store %arg11[%c16, %c0_19], %65 {strides = array<i32>} : memref<64x32xf32, #tpu.memory_space<vmem>>, vector<8x32xf32>,
    %67 = vector.extract_strided_slice %7 {offsets = [24, 0], sizes = [8, 128], strides = [1, 1]} : vector<64x128xf32> to vector<8x128xf32>
    %cst_20 = arith.constant dense<0.000000e+00> : vector<8x128xf32>
    %68 = tpu.matmul %65, %1, %cst_20 {dimension_numbers = #tpu.dot_dimension_numbers<[1], [0], [0], [1], [0, 0, 1, 1], [], []>} : vector<8x32xf32>, vector<32x128xf32>, vector<8x128xf32> -> vector<8x128xf32>
    %69 = arith.addf %67, %68 : vector<8x128xf32>
    %70 = arith.negf %69 : vector<8x128xf32>
    %71 = math.exp %70 : vector<8x128xf32>
    %cst_21 = arith.constant 1.000000e+00 : f32
    %72 = vector.broadcast %cst_21 : f32 to vector<8x128xf32>
    %73 = arith.addf %72, %71 : vector<8x128xf32>
    %74 = arith.divf %72, %73 : vector<8x128xf32>
    %75 = vector.extract_strided_slice %74 {offsets = [0, 0], sizes = [8, 32], strides = [1, 1]} : vector<8x128xf32> to vector<8x32xf32>
    %76 = vector.extract_strided_slice %74 {offsets = [0, 32], sizes = [8, 32], strides = [1, 1]} : vector<8x128xf32> to vector<8x32xf32>
    %77 = vector.extract_strided_slice %74 {offsets = [0, 96], sizes = [8, 32], strides = [1, 1]} : vector<8x128xf32> to vector<8x32xf32>
    %78 = vector.extract_strided_slice %69 {offsets = [0, 64], sizes = [8, 32], strides = [1, 1]} : vector<8x128xf32> to vector<8x32xf32>
    %79 = math.tanh %78 : vector<8x32xf32>
    %80 = arith.mulf %76, %63 : vector<8x32xf32>
    %81 = arith.mulf %75, %79 : vector<8x32xf32>
    %82 = arith.addf %80, %81 : vector<8x32xf32>
    %83 = math.tanh %82 : vector<8x32xf32>
    %84 = arith.mulf %77, %83 : vector<8x32xf32>
    %c24 = arith.constant 24 : index
    %c0_22 = arith.constant 0 : index
    %85 = vector.load %arg11[%c24, %c0_22] : memref<64x32xf32, #tpu.memory_space<vmem>>, vector<8x32xf32>
    tpu.vector_store %arg11[%c24, %c0_22], %84 {strides = array<i32>} : memref<64x32xf32, #tpu.memory_space<vmem>>, vector<8x32xf32>,
    %86 = vector.extract_strided_slice %7 {offsets = [32, 0], sizes = [8, 128], strides = [1, 1]} : vector<64x128xf32> to vector<8x128xf32>
    %cst_23 = arith.constant dense<0.000000e+00> : vector<8x128xf32>
    %87 = tpu.matmul %84, %1, %cst_23 {dimension_numbers = #tpu.dot_dimension_numbers<[1], [0], [0], [1], [0, 0, 1, 1], [], []>} : vector<8x32xf32>, vector<32x128xf32>, vector<8x128xf32> -> vector<8x128xf32>
    %88 = arith.addf %86, %87 : vector<8x128xf32>
    %89 = arith.negf %88 : vector<8x128xf32>
    %90 = math.exp %89 : vector<8x128xf32>
    %cst_24 = arith.constant 1.000000e+00 : f32
    %91 = vector.broadcast %cst_24 : f32 to vector<8x128xf32>
    %92 = arith.addf %91, %90 : vector<8x128xf32>
    %93 = arith.divf %91, %92 : vector<8x128xf32>
    %94 = vector.extract_strided_slice %93 {offsets = [0, 0], sizes = [8, 32], strides = [1, 1]} : vector<8x128xf32> to vector<8x32xf32>
    %95 = vector.extract_strided_slice %93 {offsets = [0, 32], sizes = [8, 32], strides = [1, 1]} : vector<8x128xf32> to vector<8x32xf32>
    %96 = vector.extract_strided_slice %93 {offsets = [0, 96], sizes = [8, 32], strides = [1, 1]} : vector<8x128xf32> to vector<8x32xf32>
    %97 = vector.extract_strided_slice %88 {offsets = [0, 64], sizes = [8, 32], strides = [1, 1]} : vector<8x128xf32> to vector<8x32xf32>
    %98 = math.tanh %97 : vector<8x32xf32>
    %99 = arith.mulf %95, %82 : vector<8x32xf32>
    %100 = arith.mulf %94, %98 : vector<8x32xf32>
    %101 = arith.addf %99, %100 : vector<8x32xf32>
    %102 = math.tanh %101 : vector<8x32xf32>
    %103 = arith.mulf %96, %102 : vector<8x32xf32>
    %c32 = arith.constant 32 : index
    %c0_25 = arith.constant 0 : index
    %104 = vector.load %arg11[%c32, %c0_25] : memref<64x32xf32, #tpu.memory_space<vmem>>, vector<8x32xf32>
    tpu.vector_store %arg11[%c32, %c0_25], %103 {strides = array<i32>} : memref<64x32xf32, #tpu.memory_space<vmem>>, vector<8x32xf32>,
    %105 = vector.extract_strided_slice %7 {offsets = [40, 0], sizes = [8, 128], strides = [1, 1]} : vector<64x128xf32> to vector<8x128xf32>
    %cst_26 = arith.constant dense<0.000000e+00> : vector<8x128xf32>
    %106 = tpu.matmul %103, %1, %cst_26 {dimension_numbers = #tpu.dot_dimension_numbers<[1], [0], [0], [1], [0, 0, 1, 1], [], []>} : vector<8x32xf32>, vector<32x128xf32>, vector<8x128xf32> -> vector<8x128xf32>
    %107 = arith.addf %105, %106 : vector<8x128xf32>
    %108 = arith.negf %107 : vector<8x128xf32>
    %109 = math.exp %108 : vector<8x128xf32>
    %cst_27 = arith.constant 1.000000e+00 : f32
    %110 = vector.broadcast %cst_27 : f32 to vector<8x128xf32>
    %111 = arith.addf %110, %109 : vector<8x128xf32>
    %112 = arith.divf %110, %111 : vector<8x128xf32>
    %113 = vector.extract_strided_slice %112 {offsets = [0, 0], sizes = [8, 32], strides = [1, 1]} : vector<8x128xf32> to vector<8x32xf32>
    %114 = vector.extract_strided_slice %112 {offsets = [0, 32], sizes = [8, 32], strides = [1, 1]} : vector<8x128xf32> to vector<8x32xf32>
    %115 = vector.extract_strided_slice %112 {offsets = [0, 96], sizes = [8, 32], strides = [1, 1]} : vector<8x128xf32> to vector<8x32xf32>
    %116 = vector.extract_strided_slice %107 {offsets = [0, 64], sizes = [8, 32], strides = [1, 1]} : vector<8x128xf32> to vector<8x32xf32>
    %117 = math.tanh %116 : vector<8x32xf32>
    %118 = arith.mulf %114, %101 : vector<8x32xf32>
    %119 = arith.mulf %113, %117 : vector<8x32xf32>
    %120 = arith.addf %118, %119 : vector<8x32xf32>
    %121 = math.tanh %120 : vector<8x32xf32>
    %122 = arith.mulf %115, %121 : vector<8x32xf32>
    %c40 = arith.constant 40 : index
    %c0_28 = arith.constant 0 : index
    %123 = vector.load %arg11[%c40, %c0_28] : memref<64x32xf32, #tpu.memory_space<vmem>>, vector<8x32xf32>
    tpu.vector_store %arg11[%c40, %c0_28], %122 {strides = array<i32>} : memref<64x32xf32, #tpu.memory_space<vmem>>, vector<8x32xf32>,
    %124 = vector.extract_strided_slice %7 {offsets = [48, 0], sizes = [8, 128], strides = [1, 1]} : vector<64x128xf32> to vector<8x128xf32>
    %cst_29 = arith.constant dense<0.000000e+00> : vector<8x128xf32>
    %125 = tpu.matmul %122, %1, %cst_29 {dimension_numbers = #tpu.dot_dimension_numbers<[1], [0], [0], [1], [0, 0, 1, 1], [], []>} : vector<8x32xf32>, vector<32x128xf32>, vector<8x128xf32> -> vector<8x128xf32>
    %126 = arith.addf %124, %125 : vector<8x128xf32>
    %127 = arith.negf %126 : vector<8x128xf32>
    %128 = math.exp %127 : vector<8x128xf32>
    %cst_30 = arith.constant 1.000000e+00 : f32
    %129 = vector.broadcast %cst_30 : f32 to vector<8x128xf32>
    %130 = arith.addf %129, %128 : vector<8x128xf32>
    %131 = arith.divf %129, %130 : vector<8x128xf32>
    %132 = vector.extract_strided_slice %131 {offsets = [0, 0], sizes = [8, 32], strides = [1, 1]} : vector<8x128xf32> to vector<8x32xf32>
    %133 = vector.extract_strided_slice %131 {offsets = [0, 32], sizes = [8, 32], strides = [1, 1]} : vector<8x128xf32> to vector<8x32xf32>
    %134 = vector.extract_strided_slice %131 {offsets = [0, 96], sizes = [8, 32], strides = [1, 1]} : vector<8x128xf32> to vector<8x32xf32>
    %135 = vector.extract_strided_slice %126 {offsets = [0, 64], sizes = [8, 32], strides = [1, 1]} : vector<8x128xf32> to vector<8x32xf32>
    %136 = math.tanh %135 : vector<8x32xf32>
    %137 = arith.mulf %133, %120 : vector<8x32xf32>
    %138 = arith.mulf %132, %136 : vector<8x32xf32>
    %139 = arith.addf %137, %138 : vector<8x32xf32>
    %140 = math.tanh %139 : vector<8x32xf32>
    %141 = arith.mulf %134, %140 : vector<8x32xf32>
    %c48 = arith.constant 48 : index
    %c0_31 = arith.constant 0 : index
    %142 = vector.load %arg11[%c48, %c0_31] : memref<64x32xf32, #tpu.memory_space<vmem>>, vector<8x32xf32>
    tpu.vector_store %arg11[%c48, %c0_31], %141 {strides = array<i32>} : memref<64x32xf32, #tpu.memory_space<vmem>>, vector<8x32xf32>,
    %143 = vector.extract_strided_slice %7 {offsets = [56, 0], sizes = [8, 128], strides = [1, 1]} : vector<64x128xf32> to vector<8x128xf32>
    %cst_32 = arith.constant dense<0.000000e+00> : vector<8x128xf32>
    %144 = tpu.matmul %141, %1, %cst_32 {dimension_numbers = #tpu.dot_dimension_numbers<[1], [0], [0], [1], [0, 0, 1, 1], [], []>} : vector<8x32xf32>, vector<32x128xf32>, vector<8x128xf32> -> vector<8x128xf32>
    %145 = arith.addf %143, %144 : vector<8x128xf32>
    %146 = arith.negf %145 : vector<8x128xf32>
    %147 = math.exp %146 : vector<8x128xf32>
    %cst_33 = arith.constant 1.000000e+00 : f32
    %148 = vector.broadcast %cst_33 : f32 to vector<8x128xf32>
    %149 = arith.addf %148, %147 : vector<8x128xf32>
    %150 = arith.divf %148, %149 : vector<8x128xf32>
    %151 = vector.extract_strided_slice %150 {offsets = [0, 0], sizes = [8, 32], strides = [1, 1]} : vector<8x128xf32> to vector<8x32xf32>
    %152 = vector.extract_strided_slice %150 {offsets = [0, 32], sizes = [8, 32], strides = [1, 1]} : vector<8x128xf32> to vector<8x32xf32>
    %153 = vector.extract_strided_slice %150 {offsets = [0, 96], sizes = [8, 32], strides = [1, 1]} : vector<8x128xf32> to vector<8x32xf32>
    %154 = vector.extract_strided_slice %145 {offsets = [0, 64], sizes = [8, 32], strides = [1, 1]} : vector<8x128xf32> to vector<8x32xf32>
    %155 = math.tanh %154 : vector<8x32xf32>
    %156 = arith.mulf %152, %139 : vector<8x32xf32>
    %157 = arith.mulf %151, %155 : vector<8x32xf32>
    %158 = arith.addf %156, %157 : vector<8x32xf32>
    %159 = math.tanh %158 : vector<8x32xf32>
    %160 = arith.mulf %153, %159 : vector<8x32xf32>
    %c56 = arith.constant 56 : index
    %c0_34 = arith.constant 0 : index
    %161 = vector.load %arg11[%c56, %c0_34] : memref<64x32xf32, #tpu.memory_space<vmem>>, vector<8x32xf32>
    tpu.vector_store %arg11[%c56, %c0_34], %160 {strides = array<i32>} : memref<64x32xf32, #tpu.memory_space<vmem>>, vector<8x32xf32>,
    %c0_35 = arith.constant 0 : index
    %c0_36 = arith.constant 0 : index
    %162 = vector.load %arg5[%c0_35, %c0_36] : memref<32x128xf32, #tpu.memory_space<vmem>>, vector<32x128xf32>
    %c0_37 = arith.constant 0 : index
    %c0_38 = arith.constant 0 : index
    %163 = vector.load %arg6[%c0_37, %c0_38] : memref<32x128xf32, #tpu.memory_space<vmem>>, vector<32x128xf32>
    %c0_39 = arith.constant 0 : index
    %c0_40 = arith.constant 0 : index
    %164 = vector.load %arg7[%c0_39, %c0_40] : memref<1x128xf32, #tpu.memory_space<vmem>>, vector<1x128xf32>
    %c0_41 = arith.constant 0 : index
    %c0_42 = arith.constant 0 : index
    %165 = vector.load %arg11[%c0_41, %c0_42] : memref<64x32xf32, #tpu.memory_space<vmem>>, vector<64x32xf32>
    %cst_43 = arith.constant dense<0.000000e+00> : vector<64x128xf32>
    %166 = tpu.matmul %165, %162, %cst_43 {dimension_numbers = #tpu.dot_dimension_numbers<[1], [0], [0], [1], [0, 0, 1, 1], [], []>} : vector<64x32xf32>, vector<32x128xf32>, vector<64x128xf32> -> vector<64x128xf32>
    %167 = vector.broadcast %164 : vector<1x128xf32> to vector<64x128xf32>
    %168 = arith.addf %166, %167 : vector<64x128xf32>
    %cst_44 = arith.constant 0.000000e+00 : f32
    %169 = vector.broadcast %cst_44 : f32 to vector<8x32xf32>
    %cst_45 = arith.constant 0.000000e+00 : f32
    %170 = vector.broadcast %cst_45 : f32 to vector<8x32xf32>
    %171 = vector.extract_strided_slice %168 {offsets = [0, 0], sizes = [8, 128], strides = [1, 1]} : vector<64x128xf32> to vector<8x128xf32>
    %cst_46 = arith.constant dense<0.000000e+00> : vector<8x128xf32>
    %172 = tpu.matmul %169, %163, %cst_46 {dimension_numbers = #tpu.dot_dimension_numbers<[1], [0], [0], [1], [0, 0, 1, 1], [], []>} : vector<8x32xf32>, vector<32x128xf32>, vector<8x128xf32> -> vector<8x128xf32>
    %173 = arith.addf %171, %172 : vector<8x128xf32>
    %174 = arith.negf %173 : vector<8x128xf32>
    %175 = math.exp %174 : vector<8x128xf32>
    %cst_47 = arith.constant 1.000000e+00 : f32
    %176 = vector.broadcast %cst_47 : f32 to vector<8x128xf32>
    %177 = arith.addf %176, %175 : vector<8x128xf32>
    %178 = arith.divf %176, %177 : vector<8x128xf32>
    %179 = vector.extract_strided_slice %178 {offsets = [0, 0], sizes = [8, 32], strides = [1, 1]} : vector<8x128xf32> to vector<8x32xf32>
    %180 = vector.extract_strided_slice %178 {offsets = [0, 32], sizes = [8, 32], strides = [1, 1]} : vector<8x128xf32> to vector<8x32xf32>
    %181 = vector.extract_strided_slice %178 {offsets = [0, 96], sizes = [8, 32], strides = [1, 1]} : vector<8x128xf32> to vector<8x32xf32>
    %182 = vector.extract_strided_slice %173 {offsets = [0, 64], sizes = [8, 32], strides = [1, 1]} : vector<8x128xf32> to vector<8x32xf32>
    %183 = math.tanh %182 : vector<8x32xf32>
    %184 = arith.mulf %180, %170 : vector<8x32xf32>
    %185 = arith.mulf %179, %183 : vector<8x32xf32>
    %186 = arith.addf %184, %185 : vector<8x32xf32>
    %187 = math.tanh %186 : vector<8x32xf32>
    %188 = arith.mulf %181, %187 : vector<8x32xf32>
    %189 = vector.extract_strided_slice %168 {offsets = [8, 0], sizes = [8, 128], strides = [1, 1]} : vector<64x128xf32> to vector<8x128xf32>
    %cst_48 = arith.constant dense<0.000000e+00> : vector<8x128xf32>
    %190 = tpu.matmul %188, %163, %cst_48 {dimension_numbers = #tpu.dot_dimension_numbers<[1], [0], [0], [1], [0, 0, 1, 1], [], []>} : vector<8x32xf32>, vector<32x128xf32>, vector<8x128xf32> -> vector<8x128xf32>
    %191 = arith.addf %189, %190 : vector<8x128xf32>
    %192 = arith.negf %191 : vector<8x128xf32>
    %193 = math.exp %192 : vector<8x128xf32>
    %cst_49 = arith.constant 1.000000e+00 : f32
    %194 = vector.broadcast %cst_49 : f32 to vector<8x128xf32>
    %195 = arith.addf %194, %193 : vector<8x128xf32>
    %196 = arith.divf %194, %195 : vector<8x128xf32>
    %197 = vector.extract_strided_slice %196 {offsets = [0, 0], sizes = [8, 32], strides = [1, 1]} : vector<8x128xf32> to vector<8x32xf32>
    %198 = vector.extract_strided_slice %196 {offsets = [0, 32], sizes = [8, 32], strides = [1, 1]} : vector<8x128xf32> to vector<8x32xf32>
    %199 = vector.extract_strided_slice %196 {offsets = [0, 96], sizes = [8, 32], strides = [1, 1]} : vector<8x128xf32> to vector<8x32xf32>
    %200 = vector.extract_strided_slice %191 {offsets = [0, 64], sizes = [8, 32], strides = [1, 1]} : vector<8x128xf32> to vector<8x32xf32>
    %201 = math.tanh %200 : vector<8x32xf32>
    %202 = arith.mulf %198, %186 : vector<8x32xf32>
    %203 = arith.mulf %197, %201 : vector<8x32xf32>
    %204 = arith.addf %202, %203 : vector<8x32xf32>
    %205 = math.tanh %204 : vector<8x32xf32>
    %206 = arith.mulf %199, %205 : vector<8x32xf32>
    %207 = vector.extract_strided_slice %168 {offsets = [16, 0], sizes = [8, 128], strides = [1, 1]} : vector<64x128xf32> to vector<8x128xf32>
    %cst_50 = arith.constant dense<0.000000e+00> : vector<8x128xf32>
    %208 = tpu.matmul %206, %163, %cst_50 {dimension_numbers = #tpu.dot_dimension_numbers<[1], [0], [0], [1], [0, 0, 1, 1], [], []>} : vector<8x32xf32>, vector<32x128xf32>, vector<8x128xf32> -> vector<8x128xf32>
    %209 = arith.addf %207, %208 : vector<8x128xf32>
    %210 = arith.negf %209 : vector<8x128xf32>
    %211 = math.exp %210 : vector<8x128xf32>
    %cst_51 = arith.constant 1.000000e+00 : f32
    %212 = vector.broadcast %cst_51 : f32 to vector<8x128xf32>
    %213 = arith.addf %212, %211 : vector<8x128xf32>
    %214 = arith.divf %212, %213 : vector<8x128xf32>
    %215 = vector.extract_strided_slice %214 {offsets = [0, 0], sizes = [8, 32], strides = [1, 1]} : vector<8x128xf32> to vector<8x32xf32>
    %216 = vector.extract_strided_slice %214 {offsets = [0, 32], sizes = [8, 32], strides = [1, 1]} : vector<8x128xf32> to vector<8x32xf32>
    %217 = vector.extract_strided_slice %214 {offsets = [0, 96], sizes = [8, 32], strides = [1, 1]} : vector<8x128xf32> to vector<8x32xf32>
    %218 = vector.extract_strided_slice %209 {offsets = [0, 64], sizes = [8, 32], strides = [1, 1]} : vector<8x128xf32> to vector<8x32xf32>
    %219 = math.tanh %218 : vector<8x32xf32>
    %220 = arith.mulf %216, %204 : vector<8x32xf32>
    %221 = arith.mulf %215, %219 : vector<8x32xf32>
    %222 = arith.addf %220, %221 : vector<8x32xf32>
    %223 = math.tanh %222 : vector<8x32xf32>
    %224 = arith.mulf %217, %223 : vector<8x32xf32>
    %225 = vector.extract_strided_slice %168 {offsets = [24, 0], sizes = [8, 128], strides = [1, 1]} : vector<64x128xf32> to vector<8x128xf32>
    %cst_52 = arith.constant dense<0.000000e+00> : vector<8x128xf32>
    %226 = tpu.matmul %224, %163, %cst_52 {dimension_numbers = #tpu.dot_dimension_numbers<[1], [0], [0], [1], [0, 0, 1, 1], [], []>} : vector<8x32xf32>, vector<32x128xf32>, vector<8x128xf32> -> vector<8x128xf32>
    %227 = arith.addf %225, %226 : vector<8x128xf32>
    %228 = arith.negf %227 : vector<8x128xf32>
    %229 = math.exp %228 : vector<8x128xf32>
    %cst_53 = arith.constant 1.000000e+00 : f32
    %230 = vector.broadcast %cst_53 : f32 to vector<8x128xf32>
    %231 = arith.addf %230, %229 : vector<8x128xf32>
    %232 = arith.divf %230, %231 : vector<8x128xf32>
    %233 = vector.extract_strided_slice %232 {offsets = [0, 0], sizes = [8, 32], strides = [1, 1]} : vector<8x128xf32> to vector<8x32xf32>
    %234 = vector.extract_strided_slice %232 {offsets = [0, 32], sizes = [8, 32], strides = [1, 1]} : vector<8x128xf32> to vector<8x32xf32>
    %235 = vector.extract_strided_slice %232 {offsets = [0, 96], sizes = [8, 32], strides = [1, 1]} : vector<8x128xf32> to vector<8x32xf32>
    %236 = vector.extract_strided_slice %227 {offsets = [0, 64], sizes = [8, 32], strides = [1, 1]} : vector<8x128xf32> to vector<8x32xf32>
    %237 = math.tanh %236 : vector<8x32xf32>
    %238 = arith.mulf %234, %222 : vector<8x32xf32>
    %239 = arith.mulf %233, %237 : vector<8x32xf32>
    %240 = arith.addf %238, %239 : vector<8x32xf32>
    %241 = math.tanh %240 : vector<8x32xf32>
    %242 = arith.mulf %235, %241 : vector<8x32xf32>
    %243 = vector.extract_strided_slice %168 {offsets = [32, 0], sizes = [8, 128], strides = [1, 1]} : vector<64x128xf32> to vector<8x128xf32>
    %cst_54 = arith.constant dense<0.000000e+00> : vector<8x128xf32>
    %244 = tpu.matmul %242, %163, %cst_54 {dimension_numbers = #tpu.dot_dimension_numbers<[1], [0], [0], [1], [0, 0, 1, 1], [], []>} : vector<8x32xf32>, vector<32x128xf32>, vector<8x128xf32> -> vector<8x128xf32>
    %245 = arith.addf %243, %244 : vector<8x128xf32>
    %246 = arith.negf %245 : vector<8x128xf32>
    %247 = math.exp %246 : vector<8x128xf32>
    %cst_55 = arith.constant 1.000000e+00 : f32
    %248 = vector.broadcast %cst_55 : f32 to vector<8x128xf32>
    %249 = arith.addf %248, %247 : vector<8x128xf32>
    %250 = arith.divf %248, %249 : vector<8x128xf32>
    %251 = vector.extract_strided_slice %250 {offsets = [0, 0], sizes = [8, 32], strides = [1, 1]} : vector<8x128xf32> to vector<8x32xf32>
    %252 = vector.extract_strided_slice %250 {offsets = [0, 32], sizes = [8, 32], strides = [1, 1]} : vector<8x128xf32> to vector<8x32xf32>
    %253 = vector.extract_strided_slice %250 {offsets = [0, 96], sizes = [8, 32], strides = [1, 1]} : vector<8x128xf32> to vector<8x32xf32>
    %254 = vector.extract_strided_slice %245 {offsets = [0, 64], sizes = [8, 32], strides = [1, 1]} : vector<8x128xf32> to vector<8x32xf32>
    %255 = math.tanh %254 : vector<8x32xf32>
    %256 = arith.mulf %252, %240 : vector<8x32xf32>
    %257 = arith.mulf %251, %255 : vector<8x32xf32>
    %258 = arith.addf %256, %257 : vector<8x32xf32>
    %259 = math.tanh %258 : vector<8x32xf32>
    %260 = arith.mulf %253, %259 : vector<8x32xf32>
    %261 = vector.extract_strided_slice %168 {offsets = [40, 0], sizes = [8, 128], strides = [1, 1]} : vector<64x128xf32> to vector<8x128xf32>
    %cst_56 = arith.constant dense<0.000000e+00> : vector<8x128xf32>
    %262 = tpu.matmul %260, %163, %cst_56 {dimension_numbers = #tpu.dot_dimension_numbers<[1], [0], [0], [1], [0, 0, 1, 1], [], []>} : vector<8x32xf32>, vector<32x128xf32>, vector<8x128xf32> -> vector<8x128xf32>
    %263 = arith.addf %261, %262 : vector<8x128xf32>
    %264 = arith.negf %263 : vector<8x128xf32>
    %265 = math.exp %264 : vector<8x128xf32>
    %cst_57 = arith.constant 1.000000e+00 : f32
    %266 = vector.broadcast %cst_57 : f32 to vector<8x128xf32>
    %267 = arith.addf %266, %265 : vector<8x128xf32>
    %268 = arith.divf %266, %267 : vector<8x128xf32>
    %269 = vector.extract_strided_slice %268 {offsets = [0, 0], sizes = [8, 32], strides = [1, 1]} : vector<8x128xf32> to vector<8x32xf32>
    %270 = vector.extract_strided_slice %268 {offsets = [0, 32], sizes = [8, 32], strides = [1, 1]} : vector<8x128xf32> to vector<8x32xf32>
    %271 = vector.extract_strided_slice %268 {offsets = [0, 96], sizes = [8, 32], strides = [1, 1]} : vector<8x128xf32> to vector<8x32xf32>
    %272 = vector.extract_strided_slice %263 {offsets = [0, 64], sizes = [8, 32], strides = [1, 1]} : vector<8x128xf32> to vector<8x32xf32>
    %273 = math.tanh %272 : vector<8x32xf32>
    %274 = arith.mulf %270, %258 : vector<8x32xf32>
    %275 = arith.mulf %269, %273 : vector<8x32xf32>
    %276 = arith.addf %274, %275 : vector<8x32xf32>
    %277 = math.tanh %276 : vector<8x32xf32>
    %278 = arith.mulf %271, %277 : vector<8x32xf32>
    %279 = vector.extract_strided_slice %168 {offsets = [48, 0], sizes = [8, 128], strides = [1, 1]} : vector<64x128xf32> to vector<8x128xf32>
    %cst_58 = arith.constant dense<0.000000e+00> : vector<8x128xf32>
    %280 = tpu.matmul %278, %163, %cst_58 {dimension_numbers = #tpu.dot_dimension_numbers<[1], [0], [0], [1], [0, 0, 1, 1], [], []>} : vector<8x32xf32>, vector<32x128xf32>, vector<8x128xf32> -> vector<8x128xf32>
    %281 = arith.addf %279, %280 : vector<8x128xf32>
    %282 = arith.negf %281 : vector<8x128xf32>
    %283 = math.exp %282 : vector<8x128xf32>
    %cst_59 = arith.constant 1.000000e+00 : f32
    %284 = vector.broadcast %cst_59 : f32 to vector<8x128xf32>
    %285 = arith.addf %284, %283 : vector<8x128xf32>
    %286 = arith.divf %284, %285 : vector<8x128xf32>
    %287 = vector.extract_strided_slice %286 {offsets = [0, 0], sizes = [8, 32], strides = [1, 1]} : vector<8x128xf32> to vector<8x32xf32>
    %288 = vector.extract_strided_slice %286 {offsets = [0, 32], sizes = [8, 32], strides = [1, 1]} : vector<8x128xf32> to vector<8x32xf32>
    %289 = vector.extract_strided_slice %286 {offsets = [0, 96], sizes = [8, 32], strides = [1, 1]} : vector<8x128xf32> to vector<8x32xf32>
    %290 = vector.extract_strided_slice %281 {offsets = [0, 64], sizes = [8, 32], strides = [1, 1]} : vector<8x128xf32> to vector<8x32xf32>
    %291 = math.tanh %290 : vector<8x32xf32>
    %292 = arith.mulf %288, %276 : vector<8x32xf32>
    %293 = arith.mulf %287, %291 : vector<8x32xf32>
    %294 = arith.addf %292, %293 : vector<8x32xf32>
    %295 = math.tanh %294 : vector<8x32xf32>
    %296 = arith.mulf %289, %295 : vector<8x32xf32>
    %297 = vector.extract_strided_slice %168 {offsets = [56, 0], sizes = [8, 128], strides = [1, 1]} : vector<64x128xf32> to vector<8x128xf32>
    %cst_60 = arith.constant dense<0.000000e+00> : vector<8x128xf32>
    %298 = tpu.matmul %296, %163, %cst_60 {dimension_numbers = #tpu.dot_dimension_numbers<[1], [0], [0], [1], [0, 0, 1, 1], [], []>} : vector<8x32xf32>, vector<32x128xf32>, vector<8x128xf32> -> vector<8x128xf32>
    %299 = arith.addf %297, %298 : vector<8x128xf32>
    %300 = arith.negf %299 : vector<8x128xf32>
    %301 = math.exp %300 : vector<8x128xf32>
    %cst_61 = arith.constant 1.000000e+00 : f32
    %302 = vector.broadcast %cst_61 : f32 to vector<8x128xf32>
    %303 = arith.addf %302, %301 : vector<8x128xf32>
    %304 = arith.divf %302, %303 : vector<8x128xf32>
    %305 = vector.extract_strided_slice %304 {offsets = [0, 0], sizes = [8, 32], strides = [1, 1]} : vector<8x128xf32> to vector<8x32xf32>
    %306 = vector.extract_strided_slice %304 {offsets = [0, 32], sizes = [8, 32], strides = [1, 1]} : vector<8x128xf32> to vector<8x32xf32>
    %307 = vector.extract_strided_slice %304 {offsets = [0, 96], sizes = [8, 32], strides = [1, 1]} : vector<8x128xf32> to vector<8x32xf32>
    %308 = vector.extract_strided_slice %299 {offsets = [0, 64], sizes = [8, 32], strides = [1, 1]} : vector<8x128xf32> to vector<8x32xf32>
    %309 = math.tanh %308 : vector<8x32xf32>
    %310 = arith.mulf %306, %294 : vector<8x32xf32>
    %311 = arith.mulf %305, %309 : vector<8x32xf32>
    %312 = arith.addf %310, %311 : vector<8x32xf32>
    %313 = math.tanh %312 : vector<8x32xf32>
    %314 = arith.mulf %307, %313 : vector<8x32xf32>
    %c0_62 = arith.constant 0 : index
    %c0_63 = arith.constant 0 : index
    %315 = vector.load %arg8[%c0_62, %c0_63] : memref<32x50xf32, #tpu.memory_space<vmem>>, vector<32x50xf32>
    %cst_64 = arith.constant dense<0.000000e+00> : vector<8x50xf32>
    %316 = tpu.matmul %314, %315, %cst_64 {dimension_numbers = #tpu.dot_dimension_numbers<[1], [0], [0], [1], [0, 0, 1, 1], [], []>} : vector<8x32xf32>, vector<32x50xf32>, vector<8x50xf32> -> vector<8x50xf32>
    %c0_65 = arith.constant 0 : index
    %c0_66 = arith.constant 0 : index
    %317 = vector.load %arg9[%c0_65, %c0_66] : memref<1x50xf32, #tpu.memory_space<vmem>>, vector<1x50xf32>
    %318 = vector.broadcast %317 : vector<1x50xf32> to vector<8x50xf32>
    %319 = arith.addf %316, %318 : vector<8x50xf32>
    %c0_67 = arith.constant 0 : index
    %c0_68 = arith.constant 0 : index
    %320 = vector.load %arg10[%c0_67, %c0_68] : memref<8x50xf32, #tpu.memory_space<vmem>>, vector<8x50xf32>
    tpu.vector_store %arg10[%c0_67, %c0_68], %319 {strides = array<i32>} : memref<8x50xf32, #tpu.memory_space<vmem>>, vector<8x50xf32>,
    return
  }
  func.func @transform_0(%arg0: i32) -> (i32, i32, i32) {
    %c0_i32 = arith.constant 0 : i32
    %c0_i32_0 = arith.constant 0 : i32
    %c0_i32_1 = arith.constant 0 : i32
    return %c0_i32, %arg0, %c0_i32_0 : i32, i32, i32
  }
  func.func @transform_1(%arg0: i32) -> (i32, i32) {
    %c0_i32 = arith.constant 0 : i32
    %c0_i32_0 = arith.constant 0 : i32
    %c0_i32_1 = arith.constant 0 : i32
    return %c0_i32, %c0_i32_0 : i32, i32
  }
  func.func @transform_2(%arg0: i32) -> (i32, i32) {
    %c0_i32 = arith.constant 0 : i32
    %c0_i32_0 = arith.constant 0 : i32
    %c0_i32_1 = arith.constant 0 : i32
    return %c0_i32, %c0_i32_0 : i32, i32
  }
  func.func @transform_3(%arg0: i32) -> (i32, i32) {
    %c0_i32 = arith.constant 0 : i32
    %c0_i32_0 = arith.constant 0 : i32
    %c0_i32_1 = arith.constant 0 : i32
    return %c0_i32, %c0_i32_0 : i32, i32
  }
  func.func @transform_4(%arg0: i32) -> (i32, i32) {
    %c0_i32 = arith.constant 0 : i32
    %c0_i32_0 = arith.constant 0 : i32
    %c0_i32_1 = arith.constant 0 : i32
    return %c0_i32, %c0_i32_0 : i32, i32
  }
  func.func @transform_5(%arg0: i32) -> (i32, i32) {
    %c0_i32 = arith.constant 0 : i32
    %c0_i32_0 = arith.constant 0 : i32
    %c0_i32_1 = arith.constant 0 : i32
    return %c0_i32, %c0_i32_0 : i32, i32
  }
  func.func @transform_6(%arg0: i32) -> (i32, i32) {
    %c0_i32 = arith.constant 0 : i32
    %c0_i32_0 = arith.constant 0 : i32
    %c0_i32_1 = arith.constant 0 : i32
    return %c0_i32, %c0_i32_0 : i32, i32
  }
  func.func @transform_7(%arg0: i32) -> (i32, i32) {
    %c0_i32 = arith.constant 0 : i32
    %c0_i32_0 = arith.constant 0 : i32
    %c0_i32_1 = arith.constant 0 : i32
    return %c0_i32, %c0_i32_0 : i32, i32
  }
  func.func @transform_8(%arg0: i32) -> (i32, i32) {
    %c0_i32 = arith.constant 0 : i32
    %c0_i32_0 = arith.constant 0 : i32
    %c0_i32_1 = arith.constant 0 : i32
    return %c0_i32, %c0_i32_0 : i32, i32
  }
  func.func @transform_9(%arg0: i32) -> (i32, i32) {
    %c0_i32 = arith.constant 0 : i32
    %c0_i32_0 = arith.constant 0 : i32
    return %arg0, %c0_i32 : i32, i32
  }
}

</mosaic_0001>

<llo_original>
// kernel: tpu_custom_call.1
$region0: #{tpu_custom_call.1}
  #allocation0 [shape = 'u32[]', space=smem, size = 0x4, offset = 0x4, fixed_abs, tag = 'smem constant byte address 0x4 - core index']
  #allocation1 [shape = 'u32[144,128]{1,0:T(1,128)}', space=vmem, size = 0x12000, scoped, tag = 'internal scratch']
  #allocation2 [shape = 'f32[64,32]{1,0:T(8,128)}', space=vmem, size = 0x8000, scoped, tag = 'scratch operand']
  %s0 = inlined_call_operand.hbm [shape: f32[8,8,16], index: 0, kind: input, shape index: {}]
  %s1 = inlined_call_operand.hbm [shape: f32[16,128], index: 1, kind: input, shape index: {}]
  %s2 = inlined_call_operand.hbm [shape: f32[32,128], index: 2, kind: input, shape index: {}]
  %s3 = inlined_call_operand.vmem [shape: f32[1,128], index: 3, kind: input, shape index: {}]
  %s4 = inlined_call_operand.hbm [shape: f32[32,128], index: 4, kind: input, shape index: {}]
  %s5 = inlined_call_operand.hbm [shape: f32[32,128], index: 5, kind: input, shape index: {}]
  %s6 = inlined_call_operand.vmem [shape: f32[1,128], index: 6, kind: input, shape index: {}]
  %s7 = inlined_call_operand.hbm [shape: f32[32,50], index: 7, kind: input, shape index: {}]
  %s8 = inlined_call_operand.vmem [shape: f32[1,50], index: 8, kind: input, shape index: {}]
  %s9 = inlined_call_operand.hbm [shape: f32[8,50], index: 9, kind: output, shape index: {}]
  %s10 = sld [smem:[#allocation0]]
  $region70: #{tpu_custom_call.1} parent=0
    _
  %s12 = ssub.s32 1, %s10
  %s13 = scalar_select 0, %s12, %s10
  $region1: #{tpu_custom_call.1} parent=0
    #allocation3 [shape = 'u8[32768]{0}', space=vmem, size = 0x8000, scoped, tag = 'input window, operand 0, single buffered']
    #allocation4 [shape = 's32[1]{0}', space=sflag, size = 0x4, scoped, tag = 'scoped memory for tpu_custom_call.1']
    #allocation5 [shape = 's32[1]{0}', space=sflag, size = 0x4, scoped, tag = 'scoped memory for tpu_custom_call.1']
    #allocation6 [shape = 'u8[8192]{0}', space=vmem, size = 0x2000, scoped, tag = 'input window, operand 1, single buffered']
    #allocation7 [shape = 's32[1]{0}', space=sflag, size = 0x4, scoped, tag = 'scoped memory for tpu_custom_call.1']
    #allocation8 [shape = 'u8[16384]{0}', space=vmem, size = 0x4000, scoped, tag = 'input window, operand 2, single buffered']
    #allocation9 [shape = 'u8[16384]{0}', space=vmem, size = 0x4000, scoped, tag = 'input window, operand 4, single buffered']
    #allocation10 [shape = 's32[1]{0}', space=sflag, size = 0x4, scoped, tag = 'scoped memory for tpu_custom_call.1']
    #allocation11 [shape = 'u8[16384]{0}', space=vmem, size = 0x4000, scoped, tag = 'input window, operand 5, single buffered']
    #allocation12 [shape = 'u8[16384]{0}', space=vmem, size = 0x4000, scoped, tag = 'input window, operand 7, single buffered']
    #allocation13 [shape = 's32[1]{0}', space=sflag, size = 0x4, scoped, tag = 'scoped memory for tpu_custom_call.1']
    #allocation14 [shape = 'u8[4096]{0}', space=vmem, size = 0x1000, scoped, tag = 'output window, operand 0, single buffered']
    %14 = vsyncpa [#allocation4], 0
    %15 = vsyncpa [#allocation7], 0
    %16 = vsyncpa [#allocation10], 0
    %17 = vsyncpa [#allocation13], 0
    %18 = vsyncpa [#allocation5], 0
    // Predicated region
    $region2: #{tpu_custom_call.1} parent=1 // pred_check
      _
    $region3: #{tpu_custom_call.1} parent=1 // pred_check_branch
      %20 = sbr.rel (0) target = $region5
    $region4: #{tpu_custom_call.1} parent=1 // pred_region
      %s22 = ssub.s32 1024, 1024
      %23 = vsyncadd [#allocation4], %s22
      %s24 = sshll.u32 [#allocation3], 4
      %s25 = int_to_ptr.vmem [resolvable:$true] %s24
      %30 = dma.hbm_to_vmem [thread:$0]  %s0, 1024, %s25, [#allocation4], 128, 128, 8
    $region5: #{tpu_custom_call.1} parent=1 // pred_fallthru
      _
    // Predicated region
    $region6: #{tpu_custom_call.1} parent=1 // pred_check
      _
    $region7: #{tpu_custom_call.1} parent=1 // pred_check_branch
      %32 = sbr.rel (0) target = $region9
    $region8: #{tpu_custom_call.1} parent=1 // pred_region
      %s34 = ssub.s32 256, 256
      %35 = vsyncadd [#allocation7], %s34
      %s36 = sshll.u32 [#allocation6], 4
      %s37 = int_to_ptr.vmem [resolvable:$true] %s36
      %42 = dma.hbm_to_vmem [thread:$0]  %s1, 256, %s37, [#allocation7], 128, 128, 8
    $region9: #{tpu_custom_call.1} parent=1 // pred_fallthru
      _
    // Predicated region
    $region10: #{tpu_custom_call.1} parent=1 // pred_check
      _
    $region11: #{tpu_custom_call.1} parent=1 // pred_check_branch
      %44 = sbr.rel (0) target = $region13
    $region12: #{tpu_custom_call.1} parent=1 // pred_region
      %s46 = ssub.s32 512, 512
      %47 = vsyncadd [#allocation7], %s46
      %s48 = sshll.u32 [#allocation8], 4
      %s49 = int_to_ptr.vmem [resolvable:$true] %s48
      %54 = dma.hbm_to_vmem [thread:$0]  %s2, 512, %s49, [#allocation7], 128, 128, 8
    $region13: #{tpu_custom_call.1} parent=1 // pred_fallthru
      _
    // Predicated region
    $region14: #{tpu_custom_call.1} parent=1 // pred_check
      _
    $region15: #{tpu_custom_call.1} parent=1 // pred_check_branch
      %56 = sbr.rel (0) target = $region17
    $region16: #{tpu_custom_call.1} parent=1 // pred_region
      _
    $region17: #{tpu_custom_call.1} parent=1 // pred_fallthru
      _
    // Predicated region
    $region18: #{tpu_custom_call.1} parent=1 // pred_check
      _
    $region19: #{tpu_custom_call.1} parent=1 // pred_check_branch
      %58 = sbr.rel (0) target = $region21
    $region20: #{tpu_custom_call.1} parent=1 // pred_region
      %s60 = ssub.s32 512, 512
      %61 = vsyncadd [#allocation10], %s60
      %s62 = sshll.u32 [#allocation9], 4
      %s63 = int_to_ptr.vmem [resolvable:$true] %s62
      %68 = dma.hbm_to_vmem [thread:$0]  %s4, 512, %s63, [#allocation10], 128, 128, 8
    $region21: #{tpu_custom_call.1} parent=1 // pred_fallthru
      _
    // Predicated region
    $region22: #{tpu_custom_call.1} parent=1 // pred_check
      _
    $region23: #{tpu_custom_call.1} parent=1 // pred_check_branch
      %70 = sbr.rel (0) target = $region25
    $region24: #{tpu_custom_call.1} parent=1 // pred_region
      %s72 = ssub.s32 512, 512
      %73 = vsyncadd [#allocation10], %s72
      %s74 = sshll.u32 [#allocation11], 4
      %s75 = int_to_ptr.vmem [resolvable:$true] %s74
      %80 = dma.hbm_to_vmem [thread:$0]  %s5, 512, %s75, [#allocation10], 128, 128, 8
    $region25: #{tpu_custom_call.1} parent=1 // pred_fallthru
      _
    // Predicated region
    $region26: #{tpu_custom_call.1} parent=1 // pred_check
      _
    $region27: #{tpu_custom_call.1} parent=1 // pred_check_branch
      %82 = sbr.rel (0) target = $region29
    $region28: #{tpu_custom_call.1} parent=1 // pred_region
      _
    $region29: #{tpu_custom_call.1} parent=1 // pred_fallthru
      _
    // Predicated region
    $region30: #{tpu_custom_call.1} parent=1 // pred_check
      _
    $region31: #{tpu_custom_call.1} parent=1 // pred_check_branch
      %84 = sbr.rel (0) target = $region33
    $region32: #{tpu_custom_call.1} parent=1 // pred_region
      %s86 = ssub.s32 512, 512
      %87 = vsyncadd [#allocation13], %s86
      %s88 = sshll.u32 [#allocation12], 4
      %s89 = int_to_ptr.vmem [resolvable:$true] %s88
      %94 = dma.hbm_to_vmem [thread:$0]  %s7, 512, %s89, [#allocation13], 128, 128, 8
    $region33: #{tpu_custom_call.1} parent=1 // pred_fallthru
      _
    // Predicated region
    $region34: #{tpu_custom_call.1} parent=1 // pred_check
      _
    $region35: #{tpu_custom_call.1} parent=1 // pred_check_branch
      %96 = sbr.rel (0) target = $region37
    $region36: #{tpu_custom_call.1} parent=1 // pred_region
      _
    $region37: #{tpu_custom_call.1} parent=1 // pred_fallthru
      _
    // Predicated region
    $region38: #{tpu_custom_call.1} parent=1 // pred_check
      _
    $region39: #{tpu_custom_call.1} parent=1 // pred_check_branch
      %98 = sbr.rel (0) target = $region41
    $region40: #{tpu_custom_call.1} parent=1 // pred_region
      %99 = dma.done [#allocation4], 1024
    $region41: #{tpu_custom_call.1} parent=1 // pred_fallthru
      _
    // Predicated region
    $region42: #{tpu_custom_call.1} parent=1 // pred_check
      _
    $region43: #{tpu_custom_call.1} parent=1 // pred_check_branch
      %101 = sbr.rel (0) target = $region45
    $region44: #{tpu_custom_call.1} parent=1 // pred_region
      %102 = dma.done [#allocation7], 256
    $region45: #{tpu_custom_call.1} parent=1 // pred_fallthru
      _
    // Predicated region
    $region46: #{tpu_custom_call.1} parent=1 // pred_check
      _
    $region47: #{tpu_custom_call.1} parent=1 // pred_check_branch
      %104 = sbr.rel (0) target = $region49
    $region48: #{tpu_custom_call.1} parent=1 // pred_region
      %105 = dma.done [#allocation7], 512
    $region49: #{tpu_custom_call.1} parent=1 // pred_fallthru
      _
    // Predicated region
    $region50: #{tpu_custom_call.1} parent=1 // pred_check
      _
    $region51: #{tpu_custom_call.1} parent=1 // pred_check_branch
      %107 = sbr.rel (0) target = $region53
    $region52: #{tpu_custom_call.1} parent=1 // pred_region
      %108 = dma.done [#allocation10], 512
    $region53: #{tpu_custom_call.1} parent=1 // pred_fallthru
      _
    // Predicated region
    $region54: #{tpu_custom_call.1} parent=1 // pred_check
      _
    $region55: #{tpu_custom_call.1} parent=1 // pred_check_branch
      %110 = sbr.rel (0) target = $region57
    $region56: #{tpu_custom_call.1} parent=1 // pred_region
      %111 = dma.done [#allocation10], 512
    $region57: #{tpu_custom_call.1} parent=1 // pred_fallthru
      _
    // Predicated region
    $region58: #{tpu_custom_call.1} parent=1 // pred_check
      _
    $region59: #{tpu_custom_call.1} parent=1 // pred_check_branch
      %113 = sbr.rel (0) target = $region61
    $region60: #{tpu_custom_call.1} parent=1 // pred_region
      %114 = dma.done [#allocation13], 512
    $region61: #{tpu_custom_call.1} parent=1 // pred_fallthru
      _
    %v115 = vld [vmem:[#allocation6] sm:$0xff]
    %v116 = vld [vmem:[#allocation6 + $0x8] sm:$0xff]
    %v117 = vld [vmem:[#allocation8] sm:$0xff]
    %v118 = vld [vmem:[#allocation8 + $0x8] sm:$0xff]
    %v119 = vld [vmem:[#allocation8 + $0x10] sm:$0xff]
    %v120 = vld [vmem:[#allocation8 + $0x18] sm:$0xff]
    %v121 = vld [vmem:[%s3] sm:$0x1]
    %v122 = vld [vmem:[#allocation3] sm:$0xff]
    %v123 = vld [vmem:[#allocation3 + $0x8] sm:$0xff]
    %v124 = vld [vmem:[#allocation3 + $0x10] sm:$0xff]
    %v125 = vld [vmem:[#allocation3 + $0x18] sm:$0xff]
    %v126 = vld [vmem:[#allocation3 + $0x20] sm:$0xff]
    %v127 = vld [vmem:[#allocation3 + $0x28] sm:$0xff]
    %v128 = vld [vmem:[#allocation3 + $0x30] sm:$0xff]
    %v129 = vld [vmem:[#allocation3 + $0x38] sm:$0xff]
    %v131 = vlaneseq
    %v132 = vshrl.u32 %v131, 7
    %v133 = vsub.s32 0, %v132
    %v134 = vrot.slane %v121, %v133
    %vm136 = vcmask 130048
    %v138 = vsel %vm136, %v122, 0
    %v141 = vsel %vm136, %v123, 0
    %v144 = vsel %vm136, %v124, 0
    %v147 = vsel %vm136, %v125, 0
    %v150 = vsel %vm136, %v126, 0
    %v153 = vsel %vm136, %v127, 0
    %v156 = vsel %vm136, %v128, 0
    %v159 = vsel %vm136, %v129, 0
    %161 = vmatprep.subr.mxu0 0.0
    %162 = vmatpush1.msra.mxu0 %v115
    %163 = vmatprep.subr.mxu0 0.0
    %164 = vmatpush1.msra.mxu0 %v116
    %165 = vmatprep.subr.mxu0 0.0
    %166 = vmatpush1.msra.mxu0 0.0
    %167 = vmatprep.subr.mxu0 0.0
    %168 = vmatpush1.msra.mxu0 0.0
    %169 = vmatprep.subr.mxu0 0.0
    %170 = vmatpush1.msra.mxu0 0.0
    %171 = vmatprep.subr.mxu0 0.0
    %172 = vmatpush1.msra.mxu0 0.0
    %173 = vmatprep.subr.mxu0 0.0
    %174 = vmatpush1.msra.mxu0 0.0
    %175 = vmatprep.subr.mxu0 0.0
    %176 = vmatpush1.msra.mxu0 0.0
    %177 = vmatprep.subr.mxu0 0.0
    %178 = vmatpush1.msra.mxu0 0.0
    %179 = vmatprep.subr.mxu0 0.0
    %180 = vmatpush1.msra.mxu0 0.0
    %181 = vmatprep.subr.mxu0 0.0
    %182 = vmatpush1.msra.mxu0 0.0
    %183 = vmatprep.subr.mxu0 0.0
    %184 = vmatpush1.msra.mxu0 0.0
    %185 = vmatprep.subr.mxu0 0.0
    %186 = vmatpush1.msra.mxu0 0.0
    %187 = vmatprep.subr.mxu0 0.0
    %188 = vmatpush1.msra.mxu0 0.0
    %189 = vmatprep.subr.mxu0 0.0
    %190 = vmatpush1.msra.mxu0 0.0
    %191 = vmatprep.subr.mxu0 0.0
    %192 = vmatpush1.msra.mxu0 0.0
    %193 = vmatprep.subr.mxu0 0.0
    %194 = vmatpush1.msra.mxu0 0.0
    %195 = vmatprep.subr.mxu0 0.0
    %196 = vmatpush1.msra.mxu0 0.0
    %197 = vmatprep.subr.mxu0 0.0
    %198 = vmatpush1.msra.mxu0 0.0
    %199 = vmatprep.subr.mxu0 0.0
    %200 = vmatpush1.msra.mxu0 0.0
    %201 = vmatprep.subr.mxu0 0.0
    %202 = vmatpush1.msra.mxu0 0.0
    %203 = vmatprep.subr.mxu0 0.0
    %204 = vmatpush1.msra.mxu0 0.0
    %205 = vmatprep.subr.mxu0 0.0
    %206 = vmatpush1.msra.mxu0 0.0
    %207 = vmatprep.subr.mxu0 0.0
    %208 = vmatpush1.msra.mxu0 0.0
    %209 = vmatprep.subr.mxu0 0.0
    %210 = vmatpush1.msra.mxu0 0.0
    %211 = vmatprep.subr.mxu0 0.0
    %212 = vmatpush1.msra.mxu0 0.0
    %213 = vmatprep.subr.mxu0 0.0
    %214 = vmatpush1.msra.mxu0 0.0
    %215 = vmatprep.subr.mxu0 0.0
    %216 = vmatpush1.msra.mxu0 0.0
    %217 = vmatprep.subr.mxu0 0.0
    %218 = vmatpush1.msra.mxu0 0.0
    %219 = vmatprep.subr.mxu0 0.0
    %220 = vmatpush1.msra.mxu0 0.0
    %221 = vmatprep.subr.mxu0 0.0
    %222 = vmatpush1.msra.mxu0 0.0
    %223 = vmatprep.subr.mxu0 0.0
    %224 = vmatpush1.msra.mxu0 0.0
    %225 = vmatprep.mubr.f32.mxu0 0.0
    %226 = vmatmul.mubr.f32.gmra.mrb[0].mxu0 %v138
    %v227 = vpop.f32.mrb[0].mxu0
    %v228 = vadd.f32 %v134, %v227
    %v229 = vpop.f32.mrb[0].mxu0
    %230 = vmatprep.mubr.f32.mxu0 0.0
    %231 = vmatmul.mubr.f32.gmra.mrb[0].mxu0 %v141
    %v232 = vpop.f32.mrb[0].mxu0
    %v233 = vadd.f32 %v134, %v232
    %v234 = vpop.f32.mrb[0].mxu0
    %235 = vmatprep.mubr.f32.mxu0 0.0
    %236 = vmatmul.mubr.f32.gmra.mrb[0].mxu0 %v144
    %v237 = vpop.f32.mrb[0].mxu0
    %v238 = vadd.f32 %v134, %v237
    %v239 = vpop.f32.mrb[0].mxu0
    %240 = vmatprep.mubr.f32.mxu0 0.0
    %241 = vmatmul.mubr.f32.gmra.mrb[0].mxu0 %v147
    %v242 = vpop.f32.mrb[0].mxu0
    %v243 = vadd.f32 %v134, %v242
    %v244 = vpop.f32.mrb[0].mxu0
    %245 = vmatprep.mubr.f32.mxu0 0.0
    %246 = vmatmul.mubr.f32.gmra.mrb[0].mxu0 %v150
    %v247 = vpop.f32.mrb[0].mxu0
    %v248 = vadd.f32 %v134, %v247
    %v249 = vpop.f32.mrb[0].mxu0
    %250 = vmatprep.mubr.f32.mxu0 0.0
    %251 = vmatmul.mubr.f32.gmra.mrb[0].mxu0 %v153
    %v252 = vpop.f32.mrb[0].mxu0
    %v253 = vadd.f32 %v134, %v252
    %v254 = vpop.f32.mrb[0].mxu0
    %255 = vmatprep.mubr.f32.mxu0 0.0
    %256 = vmatmul.mubr.f32.gmra.mrb[0].mxu0 %v156
    %v257 = vpop.f32.mrb[0].mxu0
    %v258 = vadd.f32 %v134, %v257
    %v259 = vpop.f32.mrb[0].mxu0
    %260 = vmatprep.mubr.f32.mxu0 0.0
    %261 = vmatmul.mubr.f32.gmra.mrb[0].mxu0 %v159
    %v262 = vpop.f32.mrb[0].mxu0
    %v263 = vadd.f32 %v134, %v262
    %v264 = vpop.f32.mrb[0].mxu0
    %265 = vdwg.mxu0
    %vm266 = vcmask 261120
    %v268 = vsel %vm266, 0.0, 0
    %270 = vmatprep.subr.mxu0 0.0
    %271 = vmatpush1.msra.mxu0 %v117
    %272 = vmatprep.subr.mxu0 0.0
    %273 = vmatpush1.msra.mxu0 %v118
    %274 = vmatprep.subr.mxu0 0.0
    %275 = vmatpush1.msra.mxu0 %v119
    %276 = vmatprep.subr.mxu0 0.0
    %277 = vmatpush1.msra.mxu0 %v120
    %278 = vmatprep.subr.mxu0 0.0
    %279 = vmatpush1.msra.mxu0 0.0
    %280 = vmatprep.subr.mxu0 0.0
    %281 = vmatpush1.msra.mxu0 0.0
    %282 = vmatprep.subr.mxu0 0.0
    %283 = vmatpush1.msra.mxu0 0.0
    %284 = vmatprep.subr.mxu0 0.0
    %285 = vmatpush1.msra.mxu0 0.0
    %286 = vmatprep.subr.mxu0 0.0
    %287 = vmatpush1.msra.mxu0 0.0
    %288 = vmatprep.subr.mxu0 0.0
    %289 = vmatpush1.msra.mxu0 0.0
    %290 = vmatprep.subr.mxu0 0.0
    %291 = vmatpush1.msra.mxu0 0.0
    %292 = vmatprep.subr.mxu0 0.0
    %293 = vmatpush1.msra.mxu0 0.0
    %294 = vmatprep.subr.mxu0 0.0
    %295 = vmatpush1.msra.mxu0 0.0
    %296 = vmatprep.subr.mxu0 0.0
    %297 = vmatpush1.msra.mxu0 0.0
    %298 = vmatprep.subr.mxu0 0.0
    %299 = vmatpush1.msra.mxu0 0.0
    %300 = vmatprep.subr.mxu0 0.0
    %301 = vmatpush1.msra.mxu0 0.0
    %302 = vmatprep.subr.mxu0 0.0
    %303 = vmatpush1.msra.mxu0 0.0
    %304 = vmatprep.subr.mxu0 0.0
    %305 = vmatpush1.msra.mxu0 0.0
    %306 = vmatprep.subr.mxu0 0.0
    %307 = vmatpush1.msra.mxu0 0.0
    %308 = vmatprep.subr.mxu0 0.0
    %309 = vmatpush1.msra.mxu0 0.0
    %310 = vmatprep.subr.mxu0 0.0
    %311 = vmatpush1.msra.mxu0 0.0
    %312 = vmatprep.subr.mxu0 0.0
    %313 = vmatpush1.msra.mxu0 0.0
    %314 = vmatprep.subr.mxu0 0.0
    %315 = vmatpush1.msra.mxu0 0.0
    %316 = vmatprep.subr.mxu0 0.0
    %317 = vmatpush1.msra.mxu0 0.0
    %318 = vmatprep.subr.mxu0 0.0
    %319 = vmatpush1.msra.mxu0 0.0
    %320 = vmatprep.subr.mxu0 0.0
    %321 = vmatpush1.msra.mxu0 0.0
    %322 = vmatprep.subr.mxu0 0.0
    %323 = vmatpush1.msra.mxu0 0.0
    %324 = vmatprep.subr.mxu0 0.0
    %325 = vmatpush1.msra.mxu0 0.0
    %326 = vmatprep.subr.mxu0 0.0
    %327 = vmatpush1.msra.mxu0 0.0
    %328 = vmatprep.subr.mxu0 0.0
    %329 = vmatpush1.msra.mxu0 0.0
    %330 = vmatprep.subr.mxu0 0.0
    %331 = vmatpush1.msra.mxu0 0.0
    %332 = vmatprep.subr.mxu0 0.0
    %333 = vmatpush1.msra.mxu0 0.0
    %334 = vmatprep.mubr.f32.mxu0 0.0
    %335 = vmatmul.mubr.f32.gmra.mrb[0].mxu0 %v268
    %v336 = vpop.f32.mrb[0].mxu0
    %v337 = vadd.f32 0.0, %v336
    %v338 = vpop.f32.mrb[0].mxu0
    %339 = vdwg.mxu0
    %v340 = vadd.f32 %v228, %v337
    %v341 = vxor.u32 %v340, 2147483648
    %v342 = vmul.f32 %v341, 1.442695
    %v343 = vpow.pop %v342
    %v344 = vadd.f32 %v343, 1.0
    %v345 = vrcp.pop %v344
    %v346 = vmul.f32 1.0, %v345
    %v347 = vtanh.pop %v340
    %v348 = vmul.f32 %v346, 0.0
    %350 = vrot.lane.b32.xlu0 %v347, 64
    %v351 = vpop.permute.xlu0 %350
    %v353 = vmul.f32 %v346, %v351
    %355 = vrot.lane.b32.xlu0 %v353, 32
    %v356 = vpop.permute.xlu0 %355
    %v358 = vadd.f32 %v348, %v356
    %v359 = vtanh.pop %v358
    %361 = vrot.lane.b32.xlu0 %v359, 64
    %v362 = vpop.permute.xlu0 %361
    %v364 = vmul.f32 %v346, %v362
    %366 = vrot.lane.b32.xlu0 %v364, 32
    %v367 = vpop.permute.xlu0 %366
    %369 = vst.msk [vmem:[#allocation2] sm:$0xff] %vm266, %v367
    %v370 = vsel %vm266, %v367, 0
    %372 = vmatprep.subr.mxu0 0.0
    %373 = vmatpush1.msra.mxu0 %v117
    %374 = vmatprep.subr.mxu0 0.0
    %375 = vmatpush1.msra.mxu0 %v118
    %376 = vmatprep.subr.mxu0 0.0
    %377 = vmatpush1.msra.mxu0 %v119
    %378 = vmatprep.subr.mxu0 0.0
    %379 = vmatpush1.msra.mxu0 %v120
    %380 = vmatprep.subr.mxu0 0.0
    %381 = vmatpush1.msra.mxu0 0.0
    %382 = vmatprep.subr.mxu0 0.0
    %383 = vmatpush1.msra.mxu0 0.0
    %384 = vmatprep.subr.mxu0 0.0
    %385 = vmatpush1.msra.mxu0 0.0
    %386 = vmatprep.subr.mxu0 0.0
    %387 = vmatpush1.msra.mxu0 0.0
    %388 = vmatprep.subr.mxu0 0.0
    %389 = vmatpush1.msra.mxu0 0.0
    %390 = vmatprep.subr.mxu0 0.0
    %391 = vmatpush1.msra.mxu0 0.0
    %392 = vmatprep.subr.mxu0 0.0
    %393 = vmatpush1.msra.mxu0 0.0
    %394 = vmatprep.subr.mxu0 0.0
    %395 = vmatpush1.msra.mxu0 0.0
    %396 = vmatprep.subr.mxu0 0.0
    %397 = vmatpush1.msra.mxu0 0.0
    %398 = vmatprep.subr.mxu0 0.0
    %399 = vmatpush1.msra.mxu0 0.0
    %400 = vmatprep.subr.mxu0 0.0
    %401 = vmatpush1.msra.mxu0 0.0
    %402 = vmatprep.subr.mxu0 0.0
    %403 = vmatpush1.msra.mxu0 0.0
    %404 = vmatprep.subr.mxu0 0.0
    %405 = vmatpush1.msra.mxu0 0.0
    %406 = vmatprep.subr.mxu0 0.0
    %407 = vmatpush1.msra.mxu0 0.0
    %408 = vmatprep.subr.mxu0 0.0
    %409 = vmatpush1.msra.mxu0 0.0
    %410 = vmatprep.subr.mxu0 0.0
    %411 = vmatpush1.msra.mxu0 0.0
    %412 = vmatprep.subr.mxu0 0.0
    %413 = vmatpush1.msra.mxu0 0.0
    %414 = vmatprep.subr.mxu0 0.0
    %415 = vmatpush1.msra.mxu0 0.0
    %416 = vmatprep.subr.mxu0 0.0
    %417 = vmatpush1.msra.mxu0 0.0
    %418 = vmatprep.subr.mxu0 0.0
    %419 = vmatpush1.msra.mxu0 0.0
    %420 = vmatprep.subr.mxu0 0.0
    %421 = vmatpush1.msra.mxu0 0.0
    %422 = vmatprep.subr.mxu0 0.0
    %423 = vmatpush1.msra.mxu0 0.0
    %424 = vmatprep.subr.mxu0 0.0
    %425 = vmatpush1.msra.mxu0 0.0
    %426 = vmatprep.subr.mxu0 0.0
    %427 = vmatpush1.msra.mxu0 0.0
    %428 = vmatprep.subr.mxu0 0.0
    %429 = vmatpush1.msra.mxu0 0.0
    %430 = vmatprep.subr.mxu0 0.0
    %431 = vmatpush1.msra.mxu0 0.0
    %432 = vmatprep.subr.mxu0 0.0
    %433 = vmatpush1.msra.mxu0 0.0
    %434 = vmatprep.subr.mxu0 0.0
    %435 = vmatpush1.msra.mxu0 0.0
    %436 = vmatprep.mubr.f32.mxu0 0.0
    %437 = vmatmul.mubr.f32.gmra.mrb[0].mxu0 %v370
    %v438 = vpop.f32.mrb[0].mxu0
    %v439 = vadd.f32 0.0, %v438
    %v440 = vpop.f32.mrb[0].mxu0
    %441 = vdwg.mxu0
    %v442 = vadd.f32 %v233, %v439
    %v443 = vxor.u32 %v442, 2147483648
    %v444 = vmul.f32 %v443, 1.442695
    %v445 = vpow.pop %v444
    %v446 = vadd.f32 %v445, 1.0
    %v447 = vrcp.pop %v446
    %v448 = vmul.f32 1.0, %v447
    %v449 = vtanh.pop %v442
    %v450 = vmul.f32 %v448, %v358
    %452 = vrot.lane.b32.xlu0 %v449, 64
    %v453 = vpop.permute.xlu0 %452
    %v455 = vmul.f32 %v448, %v453
    %457 = vrot.lane.b32.xlu0 %v455, 32
    %v458 = vpop.permute.xlu0 %457
    %v460 = vadd.f32 %v450, %v458
    %v461 = vtanh.pop %v460
    %463 = vrot.lane.b32.xlu0 %v461, 64
    %v464 = vpop.permute.xlu0 %463
    %v466 = vmul.f32 %v448, %v464
    %468 = vrot.lane.b32.xlu0 %v466, 32
    %v469 = vpop.permute.xlu0 %468
    %471 = vst.msk [vmem:[#allocation2 + $0x8] sm:$0xff] %vm266, %v469
    %v472 = vsel %vm266, %v469, 0
    %474 = vmatprep.subr.mxu0 0.0
    %475 = vmatpush1.msra.mxu0 %v117
    %476 = vmatprep.subr.mxu0 0.0
    %477 = vmatpush1.msra.mxu0 %v118
    %478 = vmatprep.subr.mxu0 0.0
    %479 = vmatpush1.msra.mxu0 %v119
    %480 = vmatprep.subr.mxu0 0.0
    %481 = vmatpush1.msra.mxu0 %v120
    %482 = vmatprep.subr.mxu0 0.0
    %483 = vmatpush1.msra.mxu0 0.0
    %484 = vmatprep.subr.mxu0 0.0
    %485 = vmatpush1.msra.mxu0 0.0
    %486 = vmatprep.subr.mxu0 0.0
    %487 = vmatpush1.msra.mxu0 0.0
    %488 = vmatprep.subr.mxu0 0.0
    %489 = vmatpush1.msra.mxu0 0.0
    %490 = vmatprep.subr.mxu0 0.0
    %491 = vmatpush1.msra.mxu0 0.0
    %492 = vmatprep.subr.mxu0 0.0
    %493 = vmatpush1.msra.mxu0 0.0
    %494 = vmatprep.subr.mxu0 0.0
    %495 = vmatpush1.msra.mxu0 0.0
    %496 = vmatprep.subr.mxu0 0.0
    %497 = vmatpush1.msra.mxu0 0.0
    %498 = vmatprep.subr.mxu0 0.0
    %499 = vmatpush1.msra.mxu0 0.0
    %500 = vmatprep.subr.mxu0 0.0
    %501 = vmatpush1.msra.mxu0 0.0
    %502 = vmatprep.subr.mxu0 0.0
    %503 = vmatpush1.msra.mxu0 0.0
    %504 = vmatprep.subr.mxu0 0.0
    %505 = vmatpush1.msra.mxu0 0.0
    %506 = vmatprep.subr.mxu0 0.0
    %507 = vmatpush1.msra.mxu0 0.0
    %508 = vmatprep.subr.mxu0 0.0
    %509 = vmatpush1.msra.mxu0 0.0
    %510 = vmatprep.subr.mxu0 0.0
    %511 = vmatpush1.msra.mxu0 0.0
    %512 = vmatprep.subr.mxu0 0.0
    %513 = vmatpush1.msra.mxu0 0.0
    %514 = vmatprep.subr.mxu0 0.0
    %515 = vmatpush1.msra.mxu0 0.0
    %516 = vmatprep.subr.mxu0 0.0
    %517 = vmatpush1.msra.mxu0 0.0
    %518 = vmatprep.subr.mxu0 0.0
    %519 = vmatpush1.msra.mxu0 0.0
    %520 = vmatprep.subr.mxu0 0.0
    %521 = vmatpush1.msra.mxu0 0.0
    %522 = vmatprep.subr.mxu0 0.0
    %523 = vmatpush1.msra.mxu0 0.0
    %524 = vmatprep.subr.mxu0 0.0
    %525 = vmatpush1.msra.mxu0 0.0
    %526 = vmatprep.subr.mxu0 0.0
    %527 = vmatpush1.msra.mxu0 0.0
    %528 = vmatprep.subr.mxu0 0.0
    %529 = vmatpush1.msra.mxu0 0.0
    %530 = vmatprep.subr.mxu0 0.0
    %531 = vmatpush1.msra.mxu0 0.0
    %532 = vmatprep.subr.mxu0 0.0
    %533 = vmatpush1.msra.mxu0 0.0
    %534 = vmatprep.subr.mxu0 0.0
    %535 = vmatpush1.msra.mxu0 0.0
    %536 = vmatprep.subr.mxu0 0.0
    %537 = vmatpush1.msra.mxu0 0.0
    %538 = vmatprep.mubr.f32.mxu0 0.0
    %539 = vmatmul.mubr.f32.gmra.mrb[0].mxu0 %v472
    %v540 = vpop.f32.mrb[0].mxu0
    %v541 = vadd.f32 0.0, %v540
    %v542 = vpop.f32.mrb[0].mxu0
    %543 = vdwg.mxu0
    %v544 = vadd.f32 %v238, %v541
    %v545 = vxor.u32 %v544, 2147483648
    %v546 = vmul.f32 %v545, 1.442695
    %v547 = vpow.pop %v546
    %v548 = vadd.f32 %v547, 1.0
    %v549 = vrcp.pop %v548
    %v550 = vmul.f32 1.0, %v549
    %v551 = vtanh.pop %v544
    %v552 = vmul.f32 %v550, %v460
    %554 = vrot.lane.b32.xlu0 %v551, 64
    %v555 = vpop.permute.xlu0 %554
    %v557 = vmul.f32 %v550, %v555
    %559 = vrot.lane.b32.xlu0 %v557, 32
    %v560 = vpop.permute.xlu0 %559
    %v562 = vadd.f32 %v552, %v560
    %v563 = vtanh.pop %v562
    %565 = vrot.lane.b32.xlu0 %v563, 64
    %v566 = vpop.permute.xlu0 %565
    %v568 = vmul.f32 %v550, %v566
    %570 = vrot.lane.b32.xlu0 %v568, 32
    %v571 = vpop.permute.xlu0 %570
    %573 = vst.msk [vmem:[#allocation2 + $0x10] sm:$0xff] %vm266, %v571
    %v574 = vsel %vm266, %v571, 0
    %576 = vmatprep.subr.mxu0 0.0
    %577 = vmatpush1.msra.mxu0 %v117
    %578 = vmatprep.subr.mxu0 0.0
    %579 = vmatpush1.msra.mxu0 %v118
    %580 = vmatprep.subr.mxu0 0.0
    %581 = vmatpush1.msra.mxu0 %v119
    %582 = vmatprep.subr.mxu0 0.0
    %583 = vmatpush1.msra.mxu0 %v120
    %584 = vmatprep.subr.mxu0 0.0
    %585 = vmatpush1.msra.mxu0 0.0
    %586 = vmatprep.subr.mxu0 0.0
    %587 = vmatpush1.msra.mxu0 0.0
    %588 = vmatprep.subr.mxu0 0.0
    %589 = vmatpush1.msra.mxu0 0.0
    %590 = vmatprep.subr.mxu0 0.0
    %591 = vmatpush1.msra.mxu0 0.0
    %592 = vmatprep.subr.mxu0 0.0
    %593 = vmatpush1.msra.mxu0 0.0
    %594 = vmatprep.subr.mxu0 0.0
    %595 = vmatpush1.msra.mxu0 0.0
    %596 = vmatprep.subr.mxu0 0.0
    %597 = vmatpush1.msra.mxu0 0.0
    %598 = vmatprep.subr.mxu0 0.0
    %599 = vmatpush1.msra.mxu0 0.0
    %600 = vmatprep.subr.mxu0 0.0
    %601 = vmatpush1.msra.mxu0 0.0
    %602 = vmatprep.subr.mxu0 0.0
    %603 = vmatpush1.msra.mxu0 0.0
    %604 = vmatprep.subr.mxu0 0.0
    %605 = vmatpush1.msra.mxu0 0.0
    %606 = vmatprep.subr.mxu0 0.0
    %607 = vmatpush1.msra.mxu0 0.0
    %608 = vmatprep.subr.mxu0 0.0
    %609 = vmatpush1.msra.mxu0 0.0
    %610 = vmatprep.subr.mxu0 0.0
    %611 = vmatpush1.msra.mxu0 0.0
    %612 = vmatprep.subr.mxu0 0.0
    %613 = vmatpush1.msra.mxu0 0.0
    %614 = vmatprep.subr.mxu0 0.0
    %615 = vmatpush1.msra.mxu0 0.0
    %616 = vmatprep.subr.mxu0 0.0
    %617 = vmatpush1.msra.mxu0 0.0
    %618 = vmatprep.subr.mxu0 0.0
    %619 = vmatpush1.msra.mxu0 0.0
    %620 = vmatprep.subr.mxu0 0.0
    %621 = vmatpush1.msra.mxu0 0.0
    %622 = vmatprep.subr.mxu0 0.0
    %623 = vmatpush1.msra.mxu0 0.0
    %624 = vmatprep.subr.mxu0 0.0
    %625 = vmatpush1.msra.mxu0 0.0
    %626 = vmatprep.subr.mxu0 0.0
    %627 = vmatpush1.msra.mxu0 0.0
    %628 = vmatprep.subr.mxu0 0.0
    %629 = vmatpush1.msra.mxu0 0.0
    %630 = vmatprep.subr.mxu0 0.0
    %631 = vmatpush1.msra.mxu0 0.0
    %632 = vmatprep.subr.mxu0 0.0
    %633 = vmatpush1.msra.mxu0 0.0
    %634 = vmatprep.subr.mxu0 0.0
    %635 = vmatpush1.msra.mxu0 0.0
    %636 = vmatprep.subr.mxu0 0.0
    %637 = vmatpush1.msra.mxu0 0.0
    %638 = vmatprep.subr.mxu0 0.0
    %639 = vmatpush1.msra.mxu0 0.0
    %640 = vmatprep.mubr.f32.mxu0 0.0
    %641 = vmatmul.mubr.f32.gmra.mrb[0].mxu0 %v574
    %v642 = vpop.f32.mrb[0].mxu0
    %v643 = vadd.f32 0.0, %v642
    %v644 = vpop.f32.mrb[0].mxu0
    %645 = vdwg.mxu0
    %v646 = vadd.f32 %v243, %v643
    %v647 = vxor.u32 %v646, 2147483648
    %v648 = vmul.f32 %v647, 1.442695
    %v649 = vpow.pop %v648
    %v650 = vadd.f32 %v649, 1.0
    %v651 = vrcp.pop %v650
    %v652 = vmul.f32 1.0, %v651
    %v653 = vtanh.pop %v646
    %v654 = vmul.f32 %v652, %v562
    %656 = vrot.lane.b32.xlu0 %v653, 64
    %v657 = vpop.permute.xlu0 %656
    %v659 = vmul.f32 %v652, %v657
    %661 = vrot.lane.b32.xlu0 %v659, 32
    %v662 = vpop.permute.xlu0 %661
    %v664 = vadd.f32 %v654, %v662
    %v665 = vtanh.pop %v664
    %667 = vrot.lane.b32.xlu0 %v665, 64
    %v668 = vpop.permute.xlu0 %667
    %v670 = vmul.f32 %v652, %v668
    %672 = vrot.lane.b32.xlu0 %v670, 32
    %v673 = vpop.permute.xlu0 %672
    %675 = vst.msk [vmem:[#allocation2 + $0x18] sm:$0xff] %vm266, %v673
    %v676 = vsel %vm266, %v673, 0
    %678 = vmatprep.subr.mxu0 0.0
    %679 = vmatpush1.msra.mxu0 %v117
    %680 = vmatprep.subr.mxu0 0.0
    %681 = vmatpush1.msra.mxu0 %v118
    %682 = vmatprep.subr.mxu0 0.0
    %683 = vmatpush1.msra.mxu0 %v119
    %684 = vmatprep.subr.mxu0 0.0
    %685 = vmatpush1.msra.mxu0 %v120
    %686 = vmatprep.subr.mxu0 0.0
    %687 = vmatpush1.msra.mxu0 0.0
    %688 = vmatprep.subr.mxu0 0.0
    %689 = vmatpush1.msra.mxu0 0.0
    %690 = vmatprep.subr.mxu0 0.0
    %691 = vmatpush1.msra.mxu0 0.0
    %692 = vmatprep.subr.mxu0 0.0
    %693 = vmatpush1.msra.mxu0 0.0
    %694 = vmatprep.subr.mxu0 0.0
    %695 = vmatpush1.msra.mxu0 0.0
    %696 = vmatprep.subr.mxu0 0.0
    %697 = vmatpush1.msra.mxu0 0.0
    %698 = vmatprep.subr.mxu0 0.0
    %699 = vmatpush1.msra.mxu0 0.0
    %700 = vmatprep.subr.mxu0 0.0
    %701 = vmatpush1.msra.mxu0 0.0
    %702 = vmatprep.subr.mxu0 0.0
    %703 = vmatpush1.msra.mxu0 0.0
    %704 = vmatprep.subr.mxu0 0.0
    %705 = vmatpush1.msra.mxu0 0.0
    %706 = vmatprep.subr.mxu0 0.0
    %707 = vmatpush1.msra.mxu0 0.0
    %708 = vmatprep.subr.mxu0 0.0
    %709 = vmatpush1.msra.mxu0 0.0
    %710 = vmatprep.subr.mxu0 0.0
    %711 = vmatpush1.msra.mxu0 0.0
    %712 = vmatprep.subr.mxu0 0.0
    %713 = vmatpush1.msra.mxu0 0.0
    %714 = vmatprep.subr.mxu0 0.0
    %715 = vmatpush1.msra.mxu0 0.0
    %716 = vmatprep.subr.mxu0 0.0
    %717 = vmatpush1.msra.mxu0 0.0
    %718 = vmatprep.subr.mxu0 0.0
    %719 = vmatpush1.msra.mxu0 0.0
    %720 = vmatprep.subr.mxu0 0.0
    %721 = vmatpush1.msra.mxu0 0.0
    %722 = vmatprep.subr.mxu0 0.0
    %723 = vmatpush1.msra.mxu0 0.0
    %724 = vmatprep.subr.mxu0 0.0
    %725 = vmatpush1.msra.mxu0 0.0
    %726 = vmatprep.subr.mxu0 0.0
    %727 = vmatpush1.msra.mxu0 0.0
    %728 = vmatprep.subr.mxu0 0.0
    %729 = vmatpush1.msra.mxu0 0.0
    %730 = vmatprep.subr.mxu0 0.0
    %731 = vmatpush1.msra.mxu0 0.0
    %732 = vmatprep.subr.mxu0 0.0
    %733 = vmatpush1.msra.mxu0 0.0
    %734 = vmatprep.subr.mxu0 0.0
    %735 = vmatpush1.msra.mxu0 0.0
    %736 = vmatprep.subr.mxu0 0.0
    %737 = vmatpush1.msra.mxu0 0.0
    %738 = vmatprep.subr.mxu0 0.0
    %739 = vmatpush1.msra.mxu0 0.0
    %740 = vmatprep.subr.mxu0 0.0
    %741 = vmatpush1.msra.mxu0 0.0
    %742 = vmatprep.mubr.f32.mxu0 0.0
    %743 = vmatmul.mubr.f32.gmra.mrb[0].mxu0 %v676
    %v744 = vpop.f32.mrb[0].mxu0
    %v745 = vadd.f32 0.0, %v744
    %v746 = vpop.f32.mrb[0].mxu0
    %747 = vdwg.mxu0
    %v748 = vadd.f32 %v248, %v745
    %v749 = vxor.u32 %v748, 2147483648
    %v750 = vmul.f32 %v749, 1.442695
    %v751 = vpow.pop %v750
    %v752 = vadd.f32 %v751, 1.0
    %v753 = vrcp.pop %v752
    %v754 = vmul.f32 1.0, %v753
    %v755 = vtanh.pop %v748
    %v756 = vmul.f32 %v754, %v664
    %758 = vrot.lane.b32.xlu0 %v755, 64
    %v759 = vpop.permute.xlu0 %758
    %v761 = vmul.f32 %v754, %v759
    %763 = vrot.lane.b32.xlu0 %v761, 32
    %v764 = vpop.permute.xlu0 %763
    %v766 = vadd.f32 %v756, %v764
    %v767 = vtanh.pop %v766
    %769 = vrot.lane.b32.xlu0 %v767, 64
    %v770 = vpop.permute.xlu0 %769
    %v772 = vmul.f32 %v754, %v770
    %774 = vrot.lane.b32.xlu0 %v772, 32
    %v775 = vpop.permute.xlu0 %774
    %777 = vst.msk [vmem:[#allocation2 + $0x20] sm:$0xff] %vm266, %v775
    %v778 = vsel %vm266, %v775, 0
    %780 = vmatprep.subr.mxu0 0.0
    %781 = vmatpush1.msra.mxu0 %v117
    %782 = vmatprep.subr.mxu0 0.0
    %783 = vmatpush1.msra.mxu0 %v118
    %784 = vmatprep.subr.mxu0 0.0
    %785 = vmatpush1.msra.mxu0 %v119
    %786 = vmatprep.subr.mxu0 0.0
    %787 = vmatpush1.msra.mxu0 %v120
    %788 = vmatprep.subr.mxu0 0.0
    %789 = vmatpush1.msra.mxu0 0.0
    %790 = vmatprep.subr.mxu0 0.0
    %791 = vmatpush1.msra.mxu0 0.0
    %792 = vmatprep.subr.mxu0 0.0
    %793 = vmatpush1.msra.mxu0 0.0
    %794 = vmatprep.subr.mxu0 0.0
    %795 = vmatpush1.msra.mxu0 0.0
    %796 = vmatprep.subr.mxu0 0.0
    %797 = vmatpush1.msra.mxu0 0.0
    %798 = vmatprep.subr.mxu0 0.0
    %799 = vmatpush1.msra.mxu0 0.0
    %800 = vmatprep.subr.mxu0 0.0
    %801 = vmatpush1.msra.mxu0 0.0
    %802 = vmatprep.subr.mxu0 0.0
    %803 = vmatpush1.msra.mxu0 0.0
    %804 = vmatprep.subr.mxu0 0.0
    %805 = vmatpush1.msra.mxu0 0.0
    %806 = vmatprep.subr.mxu0 0.0
    %807 = vmatpush1.msra.mxu0 0.0
    %808 = vmatprep.subr.mxu0 0.0
    %809 = vmatpush1.msra.mxu0 0.0
    %810 = vmatprep.subr.mxu0 0.0
    %811 = vmatpush1.msra.mxu0 0.0
    %812 = vmatprep.subr.mxu0 0.0
    %813 = vmatpush1.msra.mxu0 0.0
    %814 = vmatprep.subr.mxu0 0.0
    %815 = vmatpush1.msra.mxu0 0.0
    %816 = vmatprep.subr.mxu0 0.0
    %817 = vmatpush1.msra.mxu0 0.0
    %818 = vmatprep.subr.mxu0 0.0
    %819 = vmatpush1.msra.mxu0 0.0
    %820 = vmatprep.subr.mxu0 0.0
    %821 = vmatpush1.msra.mxu0 0.0
    %822 = vmatprep.subr.mxu0 0.0
    %823 = vmatpush1.msra.mxu0 0.0
    %824 = vmatprep.subr.mxu0 0.0
    %825 = vmatpush1.msra.mxu0 0.0
    %826 = vmatprep.subr.mxu0 0.0
    %827 = vmatpush1.msra.mxu0 0.0
    %828 = vmatprep.subr.mxu0 0.0
    %829 = vmatpush1.msra.mxu0 0.0
    %830 = vmatprep.subr.mxu0 0.0
    %831 = vmatpush1.msra.mxu0 0.0
    %832 = vmatprep.subr.mxu0 0.0
    %833 = vmatpush1.msra.mxu0 0.0
    %834 = vmatprep.subr.mxu0 0.0
    %835 = vmatpush1.msra.mxu0 0.0
    %836 = vmatprep.subr.mxu0 0.0
    %837 = vmatpush1.msra.mxu0 0.0
    %838 = vmatprep.subr.mxu0 0.0
    %839 = vmatpush1.msra.mxu0 0.0
    %840 = vmatprep.subr.mxu0 0.0
    %841 = vmatpush1.msra.mxu0 0.0
    %842 = vmatprep.subr.mxu0 0.0
    %843 = vmatpush1.msra.mxu0 0.0
    %844 = vmatprep.mubr.f32.mxu0 0.0
    %845 = vmatmul.mubr.f32.gmra.mrb[0].mxu0 %v778
    %v846 = vpop.f32.mrb[0].mxu0
    %v847 = vadd.f32 0.0, %v846
    %v848 = vpop.f32.mrb[0].mxu0
    %849 = vdwg.mxu0
    %v850 = vadd.f32 %v253, %v847
    %v851 = vxor.u32 %v850, 2147483648
    %v852 = vmul.f32 %v851, 1.442695
    %v853 = vpow.pop %v852
    %v854 = vadd.f32 %v853, 1.0
    %v855 = vrcp.pop %v854
    %v856 = vmul.f32 1.0, %v855
    %v857 = vtanh.pop %v850
    %v858 = vmul.f32 %v856, %v766
    %860 = vrot.lane.b32.xlu0 %v857, 64
    %v861 = vpop.permute.xlu0 %860
    %v863 = vmul.f32 %v856, %v861
    %865 = vrot.lane.b32.xlu0 %v863, 32
    %v866 = vpop.permute.xlu0 %865
    %v868 = vadd.f32 %v858, %v866
    %v869 = vtanh.pop %v868
    %871 = vrot.lane.b32.xlu0 %v869, 64
    %v872 = vpop.permute.xlu0 %871
    %v874 = vmul.f32 %v856, %v872
    %876 = vrot.lane.b32.xlu0 %v874, 32
    %v877 = vpop.permute.xlu0 %876
    %879 = vst.msk [vmem:[#allocation2 + $0x28] sm:$0xff] %vm266, %v877
    %v880 = vsel %vm266, %v877, 0
    %882 = vmatprep.subr.mxu0 0.0
    %883 = vmatpush1.msra.mxu0 %v117
    %884 = vmatprep.subr.mxu0 0.0
    %885 = vmatpush1.msra.mxu0 %v118
    %886 = vmatprep.subr.mxu0 0.0
    %887 = vmatpush1.msra.mxu0 %v119
    %888 = vmatprep.subr.mxu0 0.0
    %889 = vmatpush1.msra.mxu0 %v120
    %890 = vmatprep.subr.mxu0 0.0
    %891 = vmatpush1.msra.mxu0 0.0
    %892 = vmatprep.subr.mxu0 0.0
    %893 = vmatpush1.msra.mxu0 0.0
    %894 = vmatprep.subr.mxu0 0.0
    %895 = vmatpush1.msra.mxu0 0.0
    %896 = vmatprep.subr.mxu0 0.0
    %897 = vmatpush1.msra.mxu0 0.0
    %898 = vmatprep.subr.mxu0 0.0
    %899 = vmatpush1.msra.mxu0 0.0
    %900 = vmatprep.subr.mxu0 0.0
    %901 = vmatpush1.msra.mxu0 0.0
    %902 = vmatprep.subr.mxu0 0.0
    %903 = vmatpush1.msra.mxu0 0.0
    %904 = vmatprep.subr.mxu0 0.0
    %905 = vmatpush1.msra.mxu0 0.0
    %906 = vmatprep.subr.mxu0 0.0
    %907 = vmatpush1.msra.mxu0 0.0
    %908 = vmatprep.subr.mxu0 0.0
    %909 = vmatpush1.msra.mxu0 0.0
    %910 = vmatprep.subr.mxu0 0.0
    %911 = vmatpush1.msra.mxu0 0.0
    %912 = vmatprep.subr.mxu0 0.0
    %913 = vmatpush1.msra.mxu0 0.0
    %914 = vmatprep.subr.mxu0 0.0
    %915 = vmatpush1.msra.mxu0 0.0
    %916 = vmatprep.subr.mxu0 0.0
    %917 = vmatpush1.msra.mxu0 0.0
    %918 = vmatprep.subr.mxu0 0.0
    %919 = vmatpush1.msra.mxu0 0.0
    %920 = vmatprep.subr.mxu0 0.0
    %921 = vmatpush1.msra.mxu0 0.0
    %922 = vmatprep.subr.mxu0 0.0
    %923 = vmatpush1.msra.mxu0 0.0
    %924 = vmatprep.subr.mxu0 0.0
    %925 = vmatpush1.msra.mxu0 0.0
    %926 = vmatprep.subr.mxu0 0.0
    %927 = vmatpush1.msra.mxu0 0.0
    %928 = vmatprep.subr.mxu0 0.0
    %929 = vmatpush1.msra.mxu0 0.0
    %930 = vmatprep.subr.mxu0 0.0
    %931 = vmatpush1.msra.mxu0 0.0
    %932 = vmatprep.subr.mxu0 0.0
    %933 = vmatpush1.msra.mxu0 0.0
    %934 = vmatprep.subr.mxu0 0.0
    %935 = vmatpush1.msra.mxu0 0.0
    %936 = vmatprep.subr.mxu0 0.0
    %937 = vmatpush1.msra.mxu0 0.0
    %938 = vmatprep.subr.mxu0 0.0
    %939 = vmatpush1.msra.mxu0 0.0
    %940 = vmatprep.subr.mxu0 0.0
    %941 = vmatpush1.msra.mxu0 0.0
    %942 = vmatprep.subr.mxu0 0.0
    %943 = vmatpush1.msra.mxu0 0.0
    %944 = vmatprep.subr.mxu0 0.0
    %945 = vmatpush1.msra.mxu0 0.0
    %946 = vmatprep.mubr.f32.mxu0 0.0
    %947 = vmatmul.mubr.f32.gmra.mrb[0].mxu0 %v880
    %v948 = vpop.f32.mrb[0].mxu0
    %v949 = vadd.f32 0.0, %v948
    %v950 = vpop.f32.mrb[0].mxu0
    %951 = vdwg.mxu0
    %v952 = vadd.f32 %v258, %v949
    %v953 = vxor.u32 %v952, 2147483648
    %v954 = vmul.f32 %v953, 1.442695
    %v955 = vpow.pop %v954
    %v956 = vadd.f32 %v955, 1.0
    %v957 = vrcp.pop %v956
    %v958 = vmul.f32 1.0, %v957
    %v959 = vtanh.pop %v952
    %v960 = vmul.f32 %v958, %v868
    %962 = vrot.lane.b32.xlu0 %v959, 64
    %v963 = vpop.permute.xlu0 %962
    %v965 = vmul.f32 %v958, %v963
    %967 = vrot.lane.b32.xlu0 %v965, 32
    %v968 = vpop.permute.xlu0 %967
    %v970 = vadd.f32 %v960, %v968
    %v971 = vtanh.pop %v970
    %973 = vrot.lane.b32.xlu0 %v971, 64
    %v974 = vpop.permute.xlu0 %973
    %v976 = vmul.f32 %v958, %v974
    %978 = vrot.lane.b32.xlu0 %v976, 32
    %v979 = vpop.permute.xlu0 %978
    %981 = vst.msk [vmem:[#allocation2 + $0x30] sm:$0xff] %vm266, %v979
    %v982 = vsel %vm266, %v979, 0
    %984 = vmatprep.subr.mxu0 0.0
    %985 = vmatpush1.msra.mxu0 %v117
    %986 = vmatprep.subr.mxu0 0.0
    %987 = vmatpush1.msra.mxu0 %v118
    %988 = vmatprep.subr.mxu0 0.0
    %989 = vmatpush1.msra.mxu0 %v119
    %990 = vmatprep.subr.mxu0 0.0
    %991 = vmatpush1.msra.mxu0 %v120
    %992 = vmatprep.subr.mxu0 0.0
    %993 = vmatpush1.msra.mxu0 0.0
    %994 = vmatprep.subr.mxu0 0.0
    %995 = vmatpush1.msra.mxu0 0.0
    %996 = vmatprep.subr.mxu0 0.0
    %997 = vmatpush1.msra.mxu0 0.0
    %998 = vmatprep.subr.mxu0 0.0
    %999 = vmatpush1.msra.mxu0 0.0
    %1000 = vmatprep.subr.mxu0 0.0
    %1001 = vmatpush1.msra.mxu0 0.0
    %1002 = vmatprep.subr.mxu0 0.0
    %1003 = vmatpush1.msra.mxu0 0.0
    %1004 = vmatprep.subr.mxu0 0.0
    %1005 = vmatpush1.msra.mxu0 0.0
    %1006 = vmatprep.subr.mxu0 0.0
    %1007 = vmatpush1.msra.mxu0 0.0
    %1008 = vmatprep.subr.mxu0 0.0
    %1009 = vmatpush1.msra.mxu0 0.0
    %1010 = vmatprep.subr.mxu0 0.0
    %1011 = vmatpush1.msra.mxu0 0.0
    %1012 = vmatprep.subr.mxu0 0.0
    %1013 = vmatpush1.msra.mxu0 0.0
    %1014 = vmatprep.subr.mxu0 0.0
    %1015 = vmatpush1.msra.mxu0 0.0
    %1016 = vmatprep.subr.mxu0 0.0
    %1017 = vmatpush1.msra.mxu0 0.0
    %1018 = vmatprep.subr.mxu0 0.0
    %1019 = vmatpush1.msra.mxu0 0.0
    %1020 = vmatprep.subr.mxu0 0.0
    %1021 = vmatpush1.msra.mxu0 0.0
    %1022 = vmatprep.subr.mxu0 0.0
    %1023 = vmatpush1.msra.mxu0 0.0
    %1024 = vmatprep.subr.mxu0 0.0
    %1025 = vmatpush1.msra.mxu0 0.0
    %1026 = vmatprep.subr.mxu0 0.0
    %1027 = vmatpush1.msra.mxu0 0.0
    %1028 = vmatprep.subr.mxu0 0.0
    %1029 = vmatpush1.msra.mxu0 0.0
    %1030 = vmatprep.subr.mxu0 0.0
    %1031 = vmatpush1.msra.mxu0 0.0
    %1032 = vmatprep.subr.mxu0 0.0
    %1033 = vmatpush1.msra.mxu0 0.0
    %1034 = vmatprep.subr.mxu0 0.0
    %1035 = vmatpush1.msra.mxu0 0.0
    %1036 = vmatprep.subr.mxu0 0.0
    %1037 = vmatpush1.msra.mxu0 0.0
    %1038 = vmatprep.subr.mxu0 0.0
    %1039 = vmatpush1.msra.mxu0 0.0
    %1040 = vmatprep.subr.mxu0 0.0
    %1041 = vmatpush1.msra.mxu0 0.0
    %1042 = vmatprep.subr.mxu0 0.0
    %1043 = vmatpush1.msra.mxu0 0.0
    %1044 = vmatprep.subr.mxu0 0.0
    %1045 = vmatpush1.msra.mxu0 0.0
    %1046 = vmatprep.subr.mxu0 0.0
    %1047 = vmatpush1.msra.mxu0 0.0
    %1048 = vmatprep.mubr.f32.mxu0 0.0
    %1049 = vmatmul.mubr.f32.gmra.mrb[0].mxu0 %v982
    %v1050 = vpop.f32.mrb[0].mxu0
    %v1051 = vadd.f32 0.0, %v1050
    %v1052 = vpop.f32.mrb[0].mxu0
    %1053 = vdwg.mxu0
    %v1054 = vadd.f32 %v263, %v1051
    %v1055 = vxor.u32 %v1054, 2147483648
    %v1056 = vmul.f32 %v1055, 1.442695
    %v1057 = vpow.pop %v1056
    %v1058 = vadd.f32 %v1057, 1.0
    %v1059 = vrcp.pop %v1058
    %v1060 = vmul.f32 1.0, %v1059
    %v1061 = vtanh.pop %v1054
    %v1062 = vmul.f32 %v1060, %v970
    %1064 = vrot.lane.b32.xlu0 %v1061, 64
    %v1065 = vpop.permute.xlu0 %1064
    %v1067 = vmul.f32 %v1060, %v1065
    %1069 = vrot.lane.b32.xlu0 %v1067, 32
    %v1070 = vpop.permute.xlu0 %1069
    %v1072 = vadd.f32 %v1062, %v1070
    %v1073 = vtanh.pop %v1072
    %1075 = vrot.lane.b32.xlu0 %v1073, 64
    %v1076 = vpop.permute.xlu0 %1075
    %v1078 = vmul.f32 %v1060, %v1076
    %1080 = vrot.lane.b32.xlu0 %v1078, 32
    %v1081 = vpop.permute.xlu0 %1080
    %1083 = vst.msk [vmem:[#allocation2 + $0x38] sm:$0xff] %vm266, %v1081
    %v1084 = vld [vmem:[#allocation9] sm:$0xff]
    %v1085 = vld [vmem:[#allocation9 + $0x8] sm:$0xff]
    %v1086 = vld [vmem:[#allocation9 + $0x10] sm:$0xff]
    %v1087 = vld [vmem:[#allocation9 + $0x18] sm:$0xff]
    %v1088 = vld [vmem:[#allocation11] sm:$0xff]
    %v1089 = vld [vmem:[#allocation11 + $0x8] sm:$0xff]
    %v1090 = vld [vmem:[#allocation11 + $0x10] sm:$0xff]
    %v1091 = vld [vmem:[#allocation11 + $0x18] sm:$0xff]
    %v1092 = vld [vmem:[%s6] sm:$0x1]
    %v1093 = vld [vmem:[#allocation2] sm:$0xff]
    %v1094 = vld [vmem:[#allocation2 + $0x8] sm:$0xff]
    %v1095 = vld [vmem:[#allocation2 + $0x10] sm:$0xff]
    %v1096 = vld [vmem:[#allocation2 + $0x18] sm:$0xff]
    %v1097 = vld [vmem:[#allocation2 + $0x20] sm:$0xff]
    %v1098 = vld [vmem:[#allocation2 + $0x28] sm:$0xff]
    %v1099 = vld [vmem:[#allocation2 + $0x30] sm:$0xff]
    %v1100 = vld [vmem:[#allocation2 + $0x38] sm:$0xff]
    %v1102 = vlaneseq
    %v1103 = vshrl.u32 %v1102, 7
    %v1104 = vsub.s32 0, %v1103
    %v1105 = vrot.slane %v1092, %v1104
    %v1108 = vsel %vm266, %v1093, 0
    %v1111 = vsel %vm266, %v1094, 0
    %v1114 = vsel %vm266, %v1095, 0
    %v1117 = vsel %vm266, %v1096, 0
    %v1120 = vsel %vm266, %v1097, 0
    %v1123 = vsel %vm266, %v1098, 0
    %v1126 = vsel %vm266, %v1099, 0
    %v1129 = vsel %vm266, %v1100, 0
    %1131 = vmatprep.subr.mxu0 0.0
    %1132 = vmatpush1.msra.mxu0 %v1084
    %1133 = vmatprep.subr.mxu0 0.0
    %1134 = vmatpush1.msra.mxu0 %v1085
    %1135 = vmatprep.subr.mxu0 0.0
    %1136 = vmatpush1.msra.mxu0 %v1086
    %1137 = vmatprep.subr.mxu0 0.0
    %1138 = vmatpush1.msra.mxu0 %v1087
    %1139 = vmatprep.subr.mxu0 0.0
    %1140 = vmatpush1.msra.mxu0 0.0
    %1141 = vmatprep.subr.mxu0 0.0
    %1142 = vmatpush1.msra.mxu0 0.0
    %1143 = vmatprep.subr.mxu0 0.0
    %1144 = vmatpush1.msra.mxu0 0.0
    %1145 = vmatprep.subr.mxu0 0.0
    %1146 = vmatpush1.msra.mxu0 0.0
    %1147 = vmatprep.subr.mxu0 0.0
    %1148 = vmatpush1.msra.mxu0 0.0
    %1149 = vmatprep.subr.mxu0 0.0
    %1150 = vmatpush1.msra.mxu0 0.0
    %1151 = vmatprep.subr.mxu0 0.0
    %1152 = vmatpush1.msra.mxu0 0.0
    %1153 = vmatprep.subr.mxu0 0.0
    %1154 = vmatpush1.msra.mxu0 0.0
    %1155 = vmatprep.subr.mxu0 0.0
    %1156 = vmatpush1.msra.mxu0 0.0
    %1157 = vmatprep.subr.mxu0 0.0
    %1158 = vmatpush1.msra.mxu0 0.0
    %1159 = vmatprep.subr.mxu0 0.0
    %1160 = vmatpush1.msra.mxu0 0.0
    %1161 = vmatprep.subr.mxu0 0.0
    %1162 = vmatpush1.msra.mxu0 0.0
    %1163 = vmatprep.subr.mxu0 0.0
    %1164 = vmatpush1.msra.mxu0 0.0
    %1165 = vmatprep.subr.mxu0 0.0
    %1166 = vmatpush1.msra.mxu0 0.0
    %1167 = vmatprep.subr.mxu0 0.0
    %1168 = vmatpush1.msra.mxu0 0.0
    %1169 = vmatprep.subr.mxu0 0.0
    %1170 = vmatpush1.msra.mxu0 0.0
    %1171 = vmatprep.subr.mxu0 0.0
    %1172 = vmatpush1.msra.mxu0 0.0
    %1173 = vmatprep.subr.mxu0 0.0
    %1174 = vmatpush1.msra.mxu0 0.0
    %1175 = vmatprep.subr.mxu0 0.0
    %1176 = vmatpush1.msra.mxu0 0.0
    %1177 = vmatprep.subr.mxu0 0.0
    %1178 = vmatpush1.msra.mxu0 0.0
    %1179 = vmatprep.subr.mxu0 0.0
    %1180 = vmatpush1.msra.mxu0 0.0
    %1181 = vmatprep.subr.mxu0 0.0
    %1182 = vmatpush1.msra.mxu0 0.0
    %1183 = vmatprep.subr.mxu0 0.0
    %1184 = vmatpush1.msra.mxu0 0.0
    %1185 = vmatprep.subr.mxu0 0.0
    %1186 = vmatpush1.msra.mxu0 0.0
    %1187 = vmatprep.subr.mxu0 0.0
    %1188 = vmatpush1.msra.mxu0 0.0
    %1189 = vmatprep.subr.mxu0 0.0
    %1190 = vmatpush1.msra.mxu0 0.0
    %1191 = vmatprep.subr.mxu0 0.0
    %1192 = vmatpush1.msra.mxu0 0.0
    %1193 = vmatprep.subr.mxu0 0.0
    %1194 = vmatpush1.msra.mxu0 0.0
    %1195 = vmatprep.mubr.f32.mxu0 0.0
    %1196 = vmatmul.mubr.f32.gmra.mrb[0].mxu0 %v1108
    %v1197 = vpop.f32.mrb[0].mxu0
    %v1198 = vadd.f32 %v1105, %v1197
    %v1199 = vpop.f32.mrb[0].mxu0
    %1200 = vmatprep.mubr.f32.mxu0 0.0
    %1201 = vmatmul.mubr.f32.gmra.mrb[0].mxu0 %v1111
    %v1202 = vpop.f32.mrb[0].mxu0
    %v1203 = vadd.f32 %v1105, %v1202
    %v1204 = vpop.f32.mrb[0].mxu0
    %1205 = vmatprep.mubr.f32.mxu0 0.0
    %1206 = vmatmul.mubr.f32.gmra.mrb[0].mxu0 %v1114
    %v1207 = vpop.f32.mrb[0].mxu0
    %v1208 = vadd.f32 %v1105, %v1207
    %v1209 = vpop.f32.mrb[0].mxu0
    %1210 = vmatprep.mubr.f32.mxu0 0.0
    %1211 = vmatmul.mubr.f32.gmra.mrb[0].mxu0 %v1117
    %v1212 = vpop.f32.mrb[0].mxu0
    %v1213 = vadd.f32 %v1105, %v1212
    %v1214 = vpop.f32.mrb[0].mxu0
    %1215 = vmatprep.mubr.f32.mxu0 0.0
    %1216 = vmatmul.mubr.f32.gmra.mrb[0].mxu0 %v1120
    %v1217 = vpop.f32.mrb[0].mxu0
    %v1218 = vadd.f32 %v1105, %v1217
    %v1219 = vpop.f32.mrb[0].mxu0
    %1220 = vmatprep.mubr.f32.mxu0 0.0
    %1221 = vmatmul.mubr.f32.gmra.mrb[0].mxu0 %v1123
    %v1222 = vpop.f32.mrb[0].mxu0
    %v1223 = vadd.f32 %v1105, %v1222
    %v1224 = vpop.f32.mrb[0].mxu0
    %1225 = vmatprep.mubr.f32.mxu0 0.0
    %1226 = vmatmul.mubr.f32.gmra.mrb[0].mxu0 %v1126
    %v1227 = vpop.f32.mrb[0].mxu0
    %v1228 = vadd.f32 %v1105, %v1227
    %v1229 = vpop.f32.mrb[0].mxu0
    %1230 = vmatprep.mubr.f32.mxu0 0.0
    %1231 = vmatmul.mubr.f32.gmra.mrb[0].mxu0 %v1129
    %v1232 = vpop.f32.mrb[0].mxu0
    %v1233 = vadd.f32 %v1105, %v1232
    %v1234 = vpop.f32.mrb[0].mxu0
    %1235 = vdwg.mxu0
    %1236 = vmatprep.subr.mxu0 0.0
    %1237 = vmatpush1.msra.mxu0 %v1088
    %1238 = vmatprep.subr.mxu0 0.0
    %1239 = vmatpush1.msra.mxu0 %v1089
    %1240 = vmatprep.subr.mxu0 0.0
    %1241 = vmatpush1.msra.mxu0 %v1090
    %1242 = vmatprep.subr.mxu0 0.0
    %1243 = vmatpush1.msra.mxu0 %v1091
    %1244 = vmatprep.subr.mxu0 0.0
    %1245 = vmatpush1.msra.mxu0 0.0
    %1246 = vmatprep.subr.mxu0 0.0
    %1247 = vmatpush1.msra.mxu0 0.0
    %1248 = vmatprep.subr.mxu0 0.0
    %1249 = vmatpush1.msra.mxu0 0.0
    %1250 = vmatprep.subr.mxu0 0.0
    %1251 = vmatpush1.msra.mxu0 0.0
    %1252 = vmatprep.subr.mxu0 0.0
    %1253 = vmatpush1.msra.mxu0 0.0
    %1254 = vmatprep.subr.mxu0 0.0
    %1255 = vmatpush1.msra.mxu0 0.0
    %1256 = vmatprep.subr.mxu0 0.0
    %1257 = vmatpush1.msra.mxu0 0.0
    %1258 = vmatprep.subr.mxu0 0.0
    %1259 = vmatpush1.msra.mxu0 0.0
    %1260 = vmatprep.subr.mxu0 0.0
    %1261 = vmatpush1.msra.mxu0 0.0
    %1262 = vmatprep.subr.mxu0 0.0
    %1263 = vmatpush1.msra.mxu0 0.0
    %1264 = vmatprep.subr.mxu0 0.0
    %1265 = vmatpush1.msra.mxu0 0.0
    %1266 = vmatprep.subr.mxu0 0.0
    %1267 = vmatpush1.msra.mxu0 0.0
    %1268 = vmatprep.subr.mxu0 0.0
    %1269 = vmatpush1.msra.mxu0 0.0
    %1270 = vmatprep.subr.mxu0 0.0
    %1271 = vmatpush1.msra.mxu0 0.0
    %1272 = vmatprep.subr.mxu0 0.0
    %1273 = vmatpush1.msra.mxu0 0.0
    %1274 = vmatprep.subr.mxu0 0.0
    %1275 = vmatpush1.msra.mxu0 0.0
    %1276 = vmatprep.subr.mxu0 0.0
    %1277 = vmatpush1.msra.mxu0 0.0
    %1278 = vmatprep.subr.mxu0 0.0
    %1279 = vmatpush1.msra.mxu0 0.0
    %1280 = vmatprep.subr.mxu0 0.0
    %1281 = vmatpush1.msra.mxu0 0.0
    %1282 = vmatprep.subr.mxu0 0.0
    %1283 = vmatpush1.msra.mxu0 0.0
    %1284 = vmatprep.subr.mxu0 0.0
    %1285 = vmatpush1.msra.mxu0 0.0
    %1286 = vmatprep.subr.mxu0 0.0
    %1287 = vmatpush1.msra.mxu0 0.0
    %1288 = vmatprep.subr.mxu0 0.0
    %1289 = vmatpush1.msra.mxu0 0.0
    %1290 = vmatprep.subr.mxu0 0.0
    %1291 = vmatpush1.msra.mxu0 0.0
    %1292 = vmatprep.subr.mxu0 0.0
    %1293 = vmatpush1.msra.mxu0 0.0
    %1294 = vmatprep.subr.mxu0 0.0
    %1295 = vmatpush1.msra.mxu0 0.0
    %1296 = vmatprep.subr.mxu0 0.0
    %1297 = vmatpush1.msra.mxu0 0.0
    %1298 = vmatprep.subr.mxu0 0.0
    %1299 = vmatpush1.msra.mxu0 0.0
    %1300 = vmatprep.mubr.f32.mxu0 0.0
    %1301 = vmatmul.mubr.f32.gmra.mrb[0].mxu0 %v268
    %v1302 = vpop.f32.mrb[0].mxu0
    %v1303 = vadd.f32 0.0, %v1302
    %v1304 = vpop.f32.mrb[0].mxu0
    %1305 = vdwg.mxu0
    %v1306 = vadd.f32 %v1198, %v1303
    %v1307 = vxor.u32 %v1306, 2147483648
    %v1308 = vmul.f32 %v1307, 1.442695
    %v1309 = vpow.pop %v1308
    %v1310 = vadd.f32 %v1309, 1.0
    %v1311 = vrcp.pop %v1310
    %v1312 = vmul.f32 1.0, %v1311
    %v1313 = vtanh.pop %v1306
    %v1314 = vmul.f32 %v1312, 0.0
    %1316 = vrot.lane.b32.xlu0 %v1313, 64
    %v1317 = vpop.permute.xlu0 %1316
    %v1319 = vmul.f32 %v1312, %v1317
    %1321 = vrot.lane.b32.xlu0 %v1319, 32
    %v1322 = vpop.permute.xlu0 %1321
    %v1324 = vadd.f32 %v1314, %v1322
    %v1325 = vtanh.pop %v1324
    %1327 = vrot.lane.b32.xlu0 %v1325, 64
    %v1328 = vpop.permute.xlu0 %1327
    %v1330 = vmul.f32 %v1312, %v1328
    %1332 = vrot.lane.b32.xlu0 %v1330, 32
    %v1333 = vpop.permute.xlu0 %1332
    %v1334 = vsel %vm266, %v1333, 0
    %1336 = vmatprep.subr.mxu0 0.0
    %1337 = vmatpush1.msra.mxu0 %v1088
    %1338 = vmatprep.subr.mxu0 0.0
    %1339 = vmatpush1.msra.mxu0 %v1089
    %1340 = vmatprep.subr.mxu0 0.0
    %1341 = vmatpush1.msra.mxu0 %v1090
    %1342 = vmatprep.subr.mxu0 0.0
    %1343 = vmatpush1.msra.mxu0 %v1091
    %1344 = vmatprep.subr.mxu0 0.0
    %1345 = vmatpush1.msra.mxu0 0.0
    %1346 = vmatprep.subr.mxu0 0.0
    %1347 = vmatpush1.msra.mxu0 0.0
    %1348 = vmatprep.subr.mxu0 0.0
    %1349 = vmatpush1.msra.mxu0 0.0
    %1350 = vmatprep.subr.mxu0 0.0
    %1351 = vmatpush1.msra.mxu0 0.0
    %1352 = vmatprep.subr.mxu0 0.0
    %1353 = vmatpush1.msra.mxu0 0.0
    %1354 = vmatprep.subr.mxu0 0.0
    %1355 = vmatpush1.msra.mxu0 0.0
    %1356 = vmatprep.subr.mxu0 0.0
    %1357 = vmatpush1.msra.mxu0 0.0
    %1358 = vmatprep.subr.mxu0 0.0
    %1359 = vmatpush1.msra.mxu0 0.0
    %1360 = vmatprep.subr.mxu0 0.0
    %1361 = vmatpush1.msra.mxu0 0.0
    %1362 = vmatprep.subr.mxu0 0.0
    %1363 = vmatpush1.msra.mxu0 0.0
    %1364 = vmatprep.subr.mxu0 0.0
    %1365 = vmatpush1.msra.mxu0 0.0
    %1366 = vmatprep.subr.mxu0 0.0
    %1367 = vmatpush1.msra.mxu0 0.0
    %1368 = vmatprep.subr.mxu0 0.0
    %1369 = vmatpush1.msra.mxu0 0.0
    %1370 = vmatprep.subr.mxu0 0.0
    %1371 = vmatpush1.msra.mxu0 0.0
    %1372 = vmatprep.subr.mxu0 0.0
    %1373 = vmatpush1.msra.mxu0 0.0
    %1374 = vmatprep.subr.mxu0 0.0
    %1375 = vmatpush1.msra.mxu0 0.0
    %1376 = vmatprep.subr.mxu0 0.0
    %1377 = vmatpush1.msra.mxu0 0.0
    %1378 = vmatprep.subr.mxu0 0.0
    %1379 = vmatpush1.msra.mxu0 0.0
    %1380 = vmatprep.subr.mxu0 0.0
    %1381 = vmatpush1.msra.mxu0 0.0
    %1382 = vmatprep.subr.mxu0 0.0
    %1383 = vmatpush1.msra.mxu0 0.0
    %1384 = vmatprep.subr.mxu0 0.0
    %1385 = vmatpush1.msra.mxu0 0.0
    %1386 = vmatprep.subr.mxu0 0.0
    %1387 = vmatpush1.msra.mxu0 0.0
    %1388 = vmatprep.subr.mxu0 0.0
    %1389 = vmatpush1.msra.mxu0 0.0
    %1390 = vmatprep.subr.mxu0 0.0
    %1391 = vmatpush1.msra.mxu0 0.0
    %1392 = vmatprep.subr.mxu0 0.0
    %1393 = vmatpush1.msra.mxu0 0.0
    %1394 = vmatprep.subr.mxu0 0.0
    %1395 = vmatpush1.msra.mxu0 0.0
    %1396 = vmatprep.subr.mxu0 0.0
    %1397 = vmatpush1.msra.mxu0 0.0
    %1398 = vmatprep.subr.mxu0 0.0
    %1399 = vmatpush1.msra.mxu0 0.0
    %1400 = vmatprep.mubr.f32.mxu0 0.0
    %1401 = vmatmul.mubr.f32.gmra.mrb[0].mxu0 %v1334
    %v1402 = vpop.f32.mrb[0].mxu0
    %v1403 = vadd.f32 0.0, %v1402
    %v1404 = vpop.f32.mrb[0].mxu0
    %1405 = vdwg.mxu0
    %v1406 = vadd.f32 %v1203, %v1403
    %v1407 = vxor.u32 %v1406, 2147483648
    %v1408 = vmul.f32 %v1407, 1.442695
    %v1409 = vpow.pop %v1408
    %v1410 = vadd.f32 %v1409, 1.0
    %v1411 = vrcp.pop %v1410
    %v1412 = vmul.f32 1.0, %v1411
    %v1413 = vtanh.pop %v1406
    %v1414 = vmul.f32 %v1412, %v1324
    %1416 = vrot.lane.b32.xlu0 %v1413, 64
    %v1417 = vpop.permute.xlu0 %1416
    %v1419 = vmul.f32 %v1412, %v1417
    %1421 = vrot.lane.b32.xlu0 %v1419, 32
    %v1422 = vpop.permute.xlu0 %1421
    %v1424 = vadd.f32 %v1414, %v1422
    %v1425 = vtanh.pop %v1424
    %1427 = vrot.lane.b32.xlu0 %v1425, 64
    %v1428 = vpop.permute.xlu0 %1427
    %v1430 = vmul.f32 %v1412, %v1428
    %1432 = vrot.lane.b32.xlu0 %v1430, 32
    %v1433 = vpop.permute.xlu0 %1432
    %v1434 = vsel %vm266, %v1433, 0
    %1436 = vmatprep.subr.mxu0 0.0
    %1437 = vmatpush1.msra.mxu0 %v1088
    %1438 = vmatprep.subr.mxu0 0.0
    %1439 = vmatpush1.msra.mxu0 %v1089
    %1440 = vmatprep.subr.mxu0 0.0
    %1441 = vmatpush1.msra.mxu0 %v1090
    %1442 = vmatprep.subr.mxu0 0.0
    %1443 = vmatpush1.msra.mxu0 %v1091
    %1444 = vmatprep.subr.mxu0 0.0
    %1445 = vmatpush1.msra.mxu0 0.0
    %1446 = vmatprep.subr.mxu0 0.0
    %1447 = vmatpush1.msra.mxu0 0.0
    %1448 = vmatprep.subr.mxu0 0.0
    %1449 = vmatpush1.msra.mxu0 0.0
    %1450 = vmatprep.subr.mxu0 0.0
    %1451 = vmatpush1.msra.mxu0 0.0
    %1452 = vmatprep.subr.mxu0 0.0
    %1453 = vmatpush1.msra.mxu0 0.0
    %1454 = vmatprep.subr.mxu0 0.0
    %1455 = vmatpush1.msra.mxu0 0.0
    %1456 = vmatprep.subr.mxu0 0.0
    %1457 = vmatpush1.msra.mxu0 0.0
    %1458 = vmatprep.subr.mxu0 0.0
    %1459 = vmatpush1.msra.mxu0 0.0
    %1460 = vmatprep.subr.mxu0 0.0
    %1461 = vmatpush1.msra.mxu0 0.0
    %1462 = vmatprep.subr.mxu0 0.0
    %1463 = vmatpush1.msra.mxu0 0.0
    %1464 = vmatprep.subr.mxu0 0.0
    %1465 = vmatpush1.msra.mxu0 0.0
    %1466 = vmatprep.subr.mxu0 0.0
    %1467 = vmatpush1.msra.mxu0 0.0
    %1468 = vmatprep.subr.mxu0 0.0
    %1469 = vmatpush1.msra.mxu0 0.0
    %1470 = vmatprep.subr.mxu0 0.0
    %1471 = vmatpush1.msra.mxu0 0.0
    %1472 = vmatprep.subr.mxu0 0.0
    %1473 = vmatpush1.msra.mxu0 0.0
    %1474 = vmatprep.subr.mxu0 0.0
    %1475 = vmatpush1.msra.mxu0 0.0
    %1476 = vmatprep.subr.mxu0 0.0
    %1477 = vmatpush1.msra.mxu0 0.0
    %1478 = vmatprep.subr.mxu0 0.0
    %1479 = vmatpush1.msra.mxu0 0.0
    %1480 = vmatprep.subr.mxu0 0.0
    %1481 = vmatpush1.msra.mxu0 0.0
    %1482 = vmatprep.subr.mxu0 0.0
    %1483 = vmatpush1.msra.mxu0 0.0
    %1484 = vmatprep.subr.mxu0 0.0
    %1485 = vmatpush1.msra.mxu0 0.0
    %1486 = vmatprep.subr.mxu0 0.0
    %1487 = vmatpush1.msra.mxu0 0.0
    %1488 = vmatprep.subr.mxu0 0.0
    %1489 = vmatpush1.msra.mxu0 0.0
    %1490 = vmatprep.subr.mxu0 0.0
    %1491 = vmatpush1.msra.mxu0 0.0
    %1492 = vmatprep.subr.mxu0 0.0
    %1493 = vmatpush1.msra.mxu0 0.0
    %1494 = vmatprep.subr.mxu0 0.0
    %1495 = vmatpush1.msra.mxu0 0.0
    %1496 = vmatprep.subr.mxu0 0.0
    %1497 = vmatpush1.msra.mxu0 0.0
    %1498 = vmatprep.subr.mxu0 0.0
    %1499 = vmatpush1.msra.mxu0 0.0
    %1500 = vmatprep.mubr.f32.mxu0 0.0
    %1501 = vmatmul.mubr.f32.gmra.mrb[0].mxu0 %v1434
    %v1502 = vpop.f32.mrb[0].mxu0
    %v1503 = vadd.f32 0.0, %v1502
    %v1504 = vpop.f32.mrb[0].mxu0
    %1505 = vdwg.mxu0
    %v1506 = vadd.f32 %v1208, %v1503
    %v1507 = vxor.u32 %v1506, 2147483648
    %v1508 = vmul.f32 %v1507, 1.442695
    %v1509 = vpow.pop %v1508
    %v1510 = vadd.f32 %v1509, 1.0
    %v1511 = vrcp.pop %v1510
    %v1512 = vmul.f32 1.0, %v1511
    %v1513 = vtanh.pop %v1506
    %v1514 = vmul.f32 %v1512, %v1424
    %1516 = vrot.lane.b32.xlu0 %v1513, 64
    %v1517 = vpop.permute.xlu0 %1516
    %v1519 = vmul.f32 %v1512, %v1517
    %1521 = vrot.lane.b32.xlu0 %v1519, 32
    %v1522 = vpop.permute.xlu0 %1521
    %v1524 = vadd.f32 %v1514, %v1522
    %v1525 = vtanh.pop %v1524
    %1527 = vrot.lane.b32.xlu0 %v1525, 64
    %v1528 = vpop.permute.xlu0 %1527
    %v1530 = vmul.f32 %v1512, %v1528
    %1532 = vrot.lane.b32.xlu0 %v1530, 32
    %v1533 = vpop.permute.xlu0 %1532
    %v1534 = vsel %vm266, %v1533, 0
    %1536 = vmatprep.subr.mxu0 0.0
    %1537 = vmatpush1.msra.mxu0 %v1088
    %1538 = vmatprep.subr.mxu0 0.0
    %1539 = vmatpush1.msra.mxu0 %v1089
    %1540 = vmatprep.subr.mxu0 0.0
    %1541 = vmatpush1.msra.mxu0 %v1090
    %1542 = vmatprep.subr.mxu0 0.0
    %1543 = vmatpush1.msra.mxu0 %v1091
    %1544 = vmatprep.subr.mxu0 0.0
    %1545 = vmatpush1.msra.mxu0 0.0
    %1546 = vmatprep.subr.mxu0 0.0
    %1547 = vmatpush1.msra.mxu0 0.0
    %1548 = vmatprep.subr.mxu0 0.0
    %1549 = vmatpush1.msra.mxu0 0.0
    %1550 = vmatprep.subr.mxu0 0.0
    %1551 = vmatpush1.msra.mxu0 0.0
    %1552 = vmatprep.subr.mxu0 0.0
    %1553 = vmatpush1.msra.mxu0 0.0
    %1554 = vmatprep.subr.mxu0 0.0
    %1555 = vmatpush1.msra.mxu0 0.0
    %1556 = vmatprep.subr.mxu0 0.0
    %1557 = vmatpush1.msra.mxu0 0.0
    %1558 = vmatprep.subr.mxu0 0.0
    %1559 = vmatpush1.msra.mxu0 0.0
    %1560 = vmatprep.subr.mxu0 0.0
    %1561 = vmatpush1.msra.mxu0 0.0
    %1562 = vmatprep.subr.mxu0 0.0
    %1563 = vmatpush1.msra.mxu0 0.0
    %1564 = vmatprep.subr.mxu0 0.0
    %1565 = vmatpush1.msra.mxu0 0.0
    %1566 = vmatprep.subr.mxu0 0.0
    %1567 = vmatpush1.msra.mxu0 0.0
    %1568 = vmatprep.subr.mxu0 0.0
    %1569 = vmatpush1.msra.mxu0 0.0
    %1570 = vmatprep.subr.mxu0 0.0
    %1571 = vmatpush1.msra.mxu0 0.0
    %1572 = vmatprep.subr.mxu0 0.0
    %1573 = vmatpush1.msra.mxu0 0.0
    %1574 = vmatprep.subr.mxu0 0.0
    %1575 = vmatpush1.msra.mxu0 0.0
    %1576 = vmatprep.subr.mxu0 0.0
    %1577 = vmatpush1.msra.mxu0 0.0
    %1578 = vmatprep.subr.mxu0 0.0
    %1579 = vmatpush1.msra.mxu0 0.0
    %1580 = vmatprep.subr.mxu0 0.0
    %1581 = vmatpush1.msra.mxu0 0.0
    %1582 = vmatprep.subr.mxu0 0.0
    %1583 = vmatpush1.msra.mxu0 0.0
    %1584 = vmatprep.subr.mxu0 0.0
    %1585 = vmatpush1.msra.mxu0 0.0
    %1586 = vmatprep.subr.mxu0 0.0
    %1587 = vmatpush1.msra.mxu0 0.0
    %1588 = vmatprep.subr.mxu0 0.0
    %1589 = vmatpush1.msra.mxu0 0.0
    %1590 = vmatprep.subr.mxu0 0.0
    %1591 = vmatpush1.msra.mxu0 0.0
    %1592 = vmatprep.subr.mxu0 0.0
    %1593 = vmatpush1.msra.mxu0 0.0
    %1594 = vmatprep.subr.mxu0 0.0
    %1595 = vmatpush1.msra.mxu0 0.0
    %1596 = vmatprep.subr.mxu0 0.0
    %1597 = vmatpush1.msra.mxu0 0.0
    %1598 = vmatprep.subr.mxu0 0.0
    %1599 = vmatpush1.msra.mxu0 0.0
    %1600 = vmatprep.mubr.f32.mxu0 0.0
    %1601 = vmatmul.mubr.f32.gmra.mrb[0].mxu0 %v1534
    %v1602 = vpop.f32.mrb[0].mxu0
    %v1603 = vadd.f32 0.0, %v1602
    %v1604 = vpop.f32.mrb[0].mxu0
    %1605 = vdwg.mxu0
    %v1606 = vadd.f32 %v1213, %v1603
    %v1607 = vxor.u32 %v1606, 2147483648
    %v1608 = vmul.f32 %v1607, 1.442695
    %v1609 = vpow.pop %v1608
    %v1610 = vadd.f32 %v1609, 1.0
    %v1611 = vrcp.pop %v1610
    %v1612 = vmul.f32 1.0, %v1611
    %v1613 = vtanh.pop %v1606
    %v1614 = vmul.f32 %v1612, %v1524
    %1616 = vrot.lane.b32.xlu0 %v1613, 64
    %v1617 = vpop.permute.xlu0 %1616
    %v1619 = vmul.f32 %v1612, %v1617
    %1621 = vrot.lane.b32.xlu0 %v1619, 32
    %v1622 = vpop.permute.xlu0 %1621
    %v1624 = vadd.f32 %v1614, %v1622
    %v1625 = vtanh.pop %v1624
    %1627 = vrot.lane.b32.xlu0 %v1625, 64
    %v1628 = vpop.permute.xlu0 %1627
    %v1630 = vmul.f32 %v1612, %v1628
    %1632 = vrot.lane.b32.xlu0 %v1630, 32
    %v1633 = vpop.permute.xlu0 %1632
    %v1634 = vsel %vm266, %v1633, 0
    %1636 = vmatprep.subr.mxu0 0.0
    %1637 = vmatpush1.msra.mxu0 %v1088
    %1638 = vmatprep.subr.mxu0 0.0
    %1639 = vmatpush1.msra.mxu0 %v1089
    %1640 = vmatprep.subr.mxu0 0.0
    %1641 = vmatpush1.msra.mxu0 %v1090
    %1642 = vmatprep.subr.mxu0 0.0
    %1643 = vmatpush1.msra.mxu0 %v1091
    %1644 = vmatprep.subr.mxu0 0.0
    %1645 = vmatpush1.msra.mxu0 0.0
    %1646 = vmatprep.subr.mxu0 0.0
    %1647 = vmatpush1.msra.mxu0 0.0
    %1648 = vmatprep.subr.mxu0 0.0
    %1649 = vmatpush1.msra.mxu0 0.0
    %1650 = vmatprep.subr.mxu0 0.0
    %1651 = vmatpush1.msra.mxu0 0.0
    %1652 = vmatprep.subr.mxu0 0.0
    %1653 = vmatpush1.msra.mxu0 0.0
    %1654 = vmatprep.subr.mxu0 0.0
    %1655 = vmatpush1.msra.mxu0 0.0
    %1656 = vmatprep.subr.mxu0 0.0
    %1657 = vmatpush1.msra.mxu0 0.0
    %1658 = vmatprep.subr.mxu0 0.0
    %1659 = vmatpush1.msra.mxu0 0.0
    %1660 = vmatprep.subr.mxu0 0.0
    %1661 = vmatpush1.msra.mxu0 0.0
    %1662 = vmatprep.subr.mxu0 0.0
    %1663 = vmatpush1.msra.mxu0 0.0
    %1664 = vmatprep.subr.mxu0 0.0
    %1665 = vmatpush1.msra.mxu0 0.0
    %1666 = vmatprep.subr.mxu0 0.0
    %1667 = vmatpush1.msra.mxu0 0.0
    %1668 = vmatprep.subr.mxu0 0.0
    %1669 = vmatpush1.msra.mxu0 0.0
    %1670 = vmatprep.subr.mxu0 0.0
    %1671 = vmatpush1.msra.mxu0 0.0
    %1672 = vmatprep.subr.mxu0 0.0
    %1673 = vmatpush1.msra.mxu0 0.0
    %1674 = vmatprep.subr.mxu0 0.0
    %1675 = vmatpush1.msra.mxu0 0.0
    %1676 = vmatprep.subr.mxu0 0.0
    %1677 = vmatpush1.msra.mxu0 0.0
    %1678 = vmatprep.subr.mxu0 0.0
    %1679 = vmatpush1.msra.mxu0 0.0
    %1680 = vmatprep.subr.mxu0 0.0
    %1681 = vmatpush1.msra.mxu0 0.0
    %1682 = vmatprep.subr.mxu0 0.0
    %1683 = vmatpush1.msra.mxu0 0.0
    %1684 = vmatprep.subr.mxu0 0.0
    %1685 = vmatpush1.msra.mxu0 0.0
    %1686 = vmatprep.subr.mxu0 0.0
    %1687 = vmatpush1.msra.mxu0 0.0
    %1688 = vmatprep.subr.mxu0 0.0
    %1689 = vmatpush1.msra.mxu0 0.0
    %1690 = vmatprep.subr.mxu0 0.0
    %1691 = vmatpush1.msra.mxu0 0.0
    %1692 = vmatprep.subr.mxu0 0.0
    %1693 = vmatpush1.msra.mxu0 0.0
    %1694 = vmatprep.subr.mxu0 0.0
    %1695 = vmatpush1.msra.mxu0 0.0
    %1696 = vmatprep.subr.mxu0 0.0
    %1697 = vmatpush1.msra.mxu0 0.0
    %1698 = vmatprep.subr.mxu0 0.0
    %1699 = vmatpush1.msra.mxu0 0.0
    %1700 = vmatprep.mubr.f32.mxu0 0.0
    %1701 = vmatmul.mubr.f32.gmra.mrb[0].mxu0 %v1634
    %v1702 = vpop.f32.mrb[0].mxu0
    %v1703 = vadd.f32 0.0, %v1702
    %v1704 = vpop.f32.mrb[0].mxu0
    %1705 = vdwg.mxu0
    %v1706 = vadd.f32 %v1218, %v1703
    %v1707 = vxor.u32 %v1706, 2147483648
    %v1708 = vmul.f32 %v1707, 1.442695
    %v1709 = vpow.pop %v1708
    %v1710 = vadd.f32 %v1709, 1.0
    %v1711 = vrcp.pop %v1710
    %v1712 = vmul.f32 1.0, %v1711
    %v1713 = vtanh.pop %v1706
    %v1714 = vmul.f32 %v1712, %v1624
    %1716 = vrot.lane.b32.xlu0 %v1713, 64
    %v1717 = vpop.permute.xlu0 %1716
    %v1719 = vmul.f32 %v1712, %v1717
    %1721 = vrot.lane.b32.xlu0 %v1719, 32
    %v1722 = vpop.permute.xlu0 %1721
    %v1724 = vadd.f32 %v1714, %v1722
    %v1725 = vtanh.pop %v1724
    %1727 = vrot.lane.b32.xlu0 %v1725, 64
    %v1728 = vpop.permute.xlu0 %1727
    %v1730 = vmul.f32 %v1712, %v1728
    %1732 = vrot.lane.b32.xlu0 %v1730, 32
    %v1733 = vpop.permute.xlu0 %1732
    %v1734 = vsel %vm266, %v1733, 0
    %1736 = vmatprep.subr.mxu0 0.0
    %1737 = vmatpush1.msra.mxu0 %v1088
    %1738 = vmatprep.subr.mxu0 0.0
    %1739 = vmatpush1.msra.mxu0 %v1089
    %1740 = vmatprep.subr.mxu0 0.0
    %1741 = vmatpush1.msra.mxu0 %v1090
    %1742 = vmatprep.subr.mxu0 0.0
    %1743 = vmatpush1.msra.mxu0 %v1091
    %1744 = vmatprep.subr.mxu0 0.0
    %1745 = vmatpush1.msra.mxu0 0.0
    %1746 = vmatprep.subr.mxu0 0.0
    %1747 = vmatpush1.msra.mxu0 0.0
    %1748 = vmatprep.subr.mxu0 0.0
    %1749 = vmatpush1.msra.mxu0 0.0
    %1750 = vmatprep.subr.mxu0 0.0
    %1751 = vmatpush1.msra.mxu0 0.0
    %1752 = vmatprep.subr.mxu0 0.0
    %1753 = vmatpush1.msra.mxu0 0.0
    %1754 = vmatprep.subr.mxu0 0.0
    %1755 = vmatpush1.msra.mxu0 0.0
    %1756 = vmatprep.subr.mxu0 0.0
    %1757 = vmatpush1.msra.mxu0 0.0
    %1758 = vmatprep.subr.mxu0 0.0
    %1759 = vmatpush1.msra.mxu0 0.0
    %1760 = vmatprep.subr.mxu0 0.0
    %1761 = vmatpush1.msra.mxu0 0.0
    %1762 = vmatprep.subr.mxu0 0.0
    %1763 = vmatpush1.msra.mxu0 0.0
    %1764 = vmatprep.subr.mxu0 0.0
    %1765 = vmatpush1.msra.mxu0 0.0
    %1766 = vmatprep.subr.mxu0 0.0
    %1767 = vmatpush1.msra.mxu0 0.0
    %1768 = vmatprep.subr.mxu0 0.0
    %1769 = vmatpush1.msra.mxu0 0.0
    %1770 = vmatprep.subr.mxu0 0.0
    %1771 = vmatpush1.msra.mxu0 0.0
    %1772 = vmatprep.subr.mxu0 0.0
    %1773 = vmatpush1.msra.mxu0 0.0
    %1774 = vmatprep.subr.mxu0 0.0
    %1775 = vmatpush1.msra.mxu0 0.0
    %1776 = vmatprep.subr.mxu0 0.0
    %1777 = vmatpush1.msra.mxu0 0.0
    %1778 = vmatprep.subr.mxu0 0.0
    %1779 = vmatpush1.msra.mxu0 0.0
    %1780 = vmatprep.subr.mxu0 0.0
    %1781 = vmatpush1.msra.mxu0 0.0
    %1782 = vmatprep.subr.mxu0 0.0
    %1783 = vmatpush1.msra.mxu0 0.0
    %1784 = vmatprep.subr.mxu0 0.0
    %1785 = vmatpush1.msra.mxu0 0.0
    %1786 = vmatprep.subr.mxu0 0.0
    %1787 = vmatpush1.msra.mxu0 0.0
    %1788 = vmatprep.subr.mxu0 0.0
    %1789 = vmatpush1.msra.mxu0 0.0
    %1790 = vmatprep.subr.mxu0 0.0
    %1791 = vmatpush1.msra.mxu0 0.0
    %1792 = vmatprep.subr.mxu0 0.0
    %1793 = vmatpush1.msra.mxu0 0.0
    %1794 = vmatprep.subr.mxu0 0.0
    %1795 = vmatpush1.msra.mxu0 0.0
    %1796 = vmatprep.subr.mxu0 0.0
    %1797 = vmatpush1.msra.mxu0 0.0
    %1798 = vmatprep.subr.mxu0 0.0
    %1799 = vmatpush1.msra.mxu0 0.0
    %1800 = vmatprep.mubr.f32.mxu0 0.0
    %1801 = vmatmul.mubr.f32.gmra.mrb[0].mxu0 %v1734
    %v1802 = vpop.f32.mrb[0].mxu0
    %v1803 = vadd.f32 0.0, %v1802
    %v1804 = vpop.f32.mrb[0].mxu0
    %1805 = vdwg.mxu0
    %v1806 = vadd.f32 %v1223, %v1803
    %v1807 = vxor.u32 %v1806, 2147483648
    %v1808 = vmul.f32 %v1807, 1.442695
    %v1809 = vpow.pop %v1808
    %v1810 = vadd.f32 %v1809, 1.0
    %v1811 = vrcp.pop %v1810
    %v1812 = vmul.f32 1.0, %v1811
    %v1813 = vtanh.pop %v1806
    %v1814 = vmul.f32 %v1812, %v1724
    %1816 = vrot.lane.b32.xlu0 %v1813, 64
    %v1817 = vpop.permute.xlu0 %1816
    %v1819 = vmul.f32 %v1812, %v1817
    %1821 = vrot.lane.b32.xlu0 %v1819, 32
    %v1822 = vpop.permute.xlu0 %1821
    %v1824 = vadd.f32 %v1814, %v1822
    %v1825 = vtanh.pop %v1824
    %1827 = vrot.lane.b32.xlu0 %v1825, 64
    %v1828 = vpop.permute.xlu0 %1827
    %v1830 = vmul.f32 %v1812, %v1828
    %1832 = vrot.lane.b32.xlu0 %v1830, 32
    %v1833 = vpop.permute.xlu0 %1832
    %v1834 = vsel %vm266, %v1833, 0
    %1836 = vmatprep.subr.mxu0 0.0
    %1837 = vmatpush1.msra.mxu0 %v1088
    %1838 = vmatprep.subr.mxu0 0.0
    %1839 = vmatpush1.msra.mxu0 %v1089
    %1840 = vmatprep.subr.mxu0 0.0
    %1841 = vmatpush1.msra.mxu0 %v1090
    %1842 = vmatprep.subr.mxu0 0.0
    %1843 = vmatpush1.msra.mxu0 %v1091
    %1844 = vmatprep.subr.mxu0 0.0
    %1845 = vmatpush1.msra.mxu0 0.0
    %1846 = vmatprep.subr.mxu0 0.0
    %1847 = vmatpush1.msra.mxu0 0.0
    %1848 = vmatprep.subr.mxu0 0.0
    %1849 = vmatpush1.msra.mxu0 0.0
    %1850 = vmatprep.subr.mxu0 0.0
    %1851 = vmatpush1.msra.mxu0 0.0
    %1852 = vmatprep.subr.mxu0 0.0
    %1853 = vmatpush1.msra.mxu0 0.0
    %1854 = vmatprep.subr.mxu0 0.0
    %1855 = vmatpush1.msra.mxu0 0.0
    %1856 = vmatprep.subr.mxu0 0.0
    %1857 = vmatpush1.msra.mxu0 0.0
    %1858 = vmatprep.subr.mxu0 0.0
    %1859 = vmatpush1.msra.mxu0 0.0
    %1860 = vmatprep.subr.mxu0 0.0
    %1861 = vmatpush1.msra.mxu0 0.0
    %1862 = vmatprep.subr.mxu0 0.0
    %1863 = vmatpush1.msra.mxu0 0.0
    %1864 = vmatprep.subr.mxu0 0.0
    %1865 = vmatpush1.msra.mxu0 0.0
    %1866 = vmatprep.subr.mxu0 0.0
    %1867 = vmatpush1.msra.mxu0 0.0
    %1868 = vmatprep.subr.mxu0 0.0
    %1869 = vmatpush1.msra.mxu0 0.0
    %1870 = vmatprep.subr.mxu0 0.0
    %1871 = vmatpush1.msra.mxu0 0.0
    %1872 = vmatprep.subr.mxu0 0.0
    %1873 = vmatpush1.msra.mxu0 0.0
    %1874 = vmatprep.subr.mxu0 0.0
    %1875 = vmatpush1.msra.mxu0 0.0
    %1876 = vmatprep.subr.mxu0 0.0
    %1877 = vmatpush1.msra.mxu0 0.0
    %1878 = vmatprep.subr.mxu0 0.0
    %1879 = vmatpush1.msra.mxu0 0.0
    %1880 = vmatprep.subr.mxu0 0.0
    %1881 = vmatpush1.msra.mxu0 0.0
    %1882 = vmatprep.subr.mxu0 0.0
    %1883 = vmatpush1.msra.mxu0 0.0
    %1884 = vmatprep.subr.mxu0 0.0
    %1885 = vmatpush1.msra.mxu0 0.0
    %1886 = vmatprep.subr.mxu0 0.0
    %1887 = vmatpush1.msra.mxu0 0.0
    %1888 = vmatprep.subr.mxu0 0.0
    %1889 = vmatpush1.msra.mxu0 0.0
    %1890 = vmatprep.subr.mxu0 0.0
    %1891 = vmatpush1.msra.mxu0 0.0
    %1892 = vmatprep.subr.mxu0 0.0
    %1893 = vmatpush1.msra.mxu0 0.0
    %1894 = vmatprep.subr.mxu0 0.0
    %1895 = vmatpush1.msra.mxu0 0.0
    %1896 = vmatprep.subr.mxu0 0.0
    %1897 = vmatpush1.msra.mxu0 0.0
    %1898 = vmatprep.subr.mxu0 0.0
    %1899 = vmatpush1.msra.mxu0 0.0
    %1900 = vmatprep.mubr.f32.mxu0 0.0
    %1901 = vmatmul.mubr.f32.gmra.mrb[0].mxu0 %v1834
    %v1902 = vpop.f32.mrb[0].mxu0
    %v1903 = vadd.f32 0.0, %v1902
    %v1904 = vpop.f32.mrb[0].mxu0
    %1905 = vdwg.mxu0
    %v1906 = vadd.f32 %v1228, %v1903
    %v1907 = vxor.u32 %v1906, 2147483648
    %v1908 = vmul.f32 %v1907, 1.442695
    %v1909 = vpow.pop %v1908
    %v1910 = vadd.f32 %v1909, 1.0
    %v1911 = vrcp.pop %v1910
    %v1912 = vmul.f32 1.0, %v1911
    %v1913 = vtanh.pop %v1906
    %v1914 = vmul.f32 %v1912, %v1824
    %1916 = vrot.lane.b32.xlu0 %v1913, 64
    %v1917 = vpop.permute.xlu0 %1916
    %v1919 = vmul.f32 %v1912, %v1917
    %1921 = vrot.lane.b32.xlu0 %v1919, 32
    %v1922 = vpop.permute.xlu0 %1921
    %v1924 = vadd.f32 %v1914, %v1922
    %v1925 = vtanh.pop %v1924
    %1927 = vrot.lane.b32.xlu0 %v1925, 64
    %v1928 = vpop.permute.xlu0 %1927
    %v1930 = vmul.f32 %v1912, %v1928
    %1932 = vrot.lane.b32.xlu0 %v1930, 32
    %v1933 = vpop.permute.xlu0 %1932
    %v1934 = vsel %vm266, %v1933, 0
    %1936 = vmatprep.subr.mxu0 0.0
    %1937 = vmatpush1.msra.mxu0 %v1088
    %1938 = vmatprep.subr.mxu0 0.0
    %1939 = vmatpush1.msra.mxu0 %v1089
    %1940 = vmatprep.subr.mxu0 0.0
    %1941 = vmatpush1.msra.mxu0 %v1090
    %1942 = vmatprep.subr.mxu0 0.0
    %1943 = vmatpush1.msra.mxu0 %v1091
    %1944 = vmatprep.subr.mxu0 0.0
    %1945 = vmatpush1.msra.mxu0 0.0
    %1946 = vmatprep.subr.mxu0 0.0
    %1947 = vmatpush1.msra.mxu0 0.0
    %1948 = vmatprep.subr.mxu0 0.0
    %1949 = vmatpush1.msra.mxu0 0.0
    %1950 = vmatprep.subr.mxu0 0.0
    %1951 = vmatpush1.msra.mxu0 0.0
    %1952 = vmatprep.subr.mxu0 0.0
    %1953 = vmatpush1.msra.mxu0 0.0
    %1954 = vmatprep.subr.mxu0 0.0
    %1955 = vmatpush1.msra.mxu0 0.0
    %1956 = vmatprep.subr.mxu0 0.0
    %1957 = vmatpush1.msra.mxu0 0.0
    %1958 = vmatprep.subr.mxu0 0.0
    %1959 = vmatpush1.msra.mxu0 0.0
    %1960 = vmatprep.subr.mxu0 0.0
    %1961 = vmatpush1.msra.mxu0 0.0
    %1962 = vmatprep.subr.mxu0 0.0
    %1963 = vmatpush1.msra.mxu0 0.0
    %1964 = vmatprep.subr.mxu0 0.0
    %1965 = vmatpush1.msra.mxu0 0.0
    %1966 = vmatprep.subr.mxu0 0.0
    %1967 = vmatpush1.msra.mxu0 0.0
    %1968 = vmatprep.subr.mxu0 0.0
    %1969 = vmatpush1.msra.mxu0 0.0
    %1970 = vmatprep.subr.mxu0 0.0
    %1971 = vmatpush1.msra.mxu0 0.0
    %1972 = vmatprep.subr.mxu0 0.0
    %1973 = vmatpush1.msra.mxu0 0.0
    %1974 = vmatprep.subr.mxu0 0.0
    %1975 = vmatpush1.msra.mxu0 0.0
    %1976 = vmatprep.subr.mxu0 0.0
    %1977 = vmatpush1.msra.mxu0 0.0
    %1978 = vmatprep.subr.mxu0 0.0
    %1979 = vmatpush1.msra.mxu0 0.0
    %1980 = vmatprep.subr.mxu0 0.0
    %1981 = vmatpush1.msra.mxu0 0.0
    %1982 = vmatprep.subr.mxu0 0.0
    %1983 = vmatpush1.msra.mxu0 0.0
    %1984 = vmatprep.subr.mxu0 0.0
    %1985 = vmatpush1.msra.mxu0 0.0
    %1986 = vmatprep.subr.mxu0 0.0
    %1987 = vmatpush1.msra.mxu0 0.0
    %1988 = vmatprep.subr.mxu0 0.0
    %1989 = vmatpush1.msra.mxu0 0.0
    %1990 = vmatprep.subr.mxu0 0.0
    %1991 = vmatpush1.msra.mxu0 0.0
    %1992 = vmatprep.subr.mxu0 0.0
    %1993 = vmatpush1.msra.mxu0 0.0
    %1994 = vmatprep.subr.mxu0 0.0
    %1995 = vmatpush1.msra.mxu0 0.0
    %1996 = vmatprep.subr.mxu0 0.0
    %1997 = vmatpush1.msra.mxu0 0.0
    %1998 = vmatprep.subr.mxu0 0.0
    %1999 = vmatpush1.msra.mxu0 0.0
    %2000 = vmatprep.mubr.f32.mxu0 0.0
    %2001 = vmatmul.mubr.f32.gmra.mrb[0].mxu0 %v1934
    %v2002 = vpop.f32.mrb[0].mxu0
    %v2003 = vadd.f32 0.0, %v2002
    %v2004 = vpop.f32.mrb[0].mxu0
    %2005 = vdwg.mxu0
    %v2006 = vadd.f32 %v1233, %v2003
    %v2007 = vxor.u32 %v2006, 2147483648
    %v2008 = vmul.f32 %v2007, 1.442695
    %v2009 = vpow.pop %v2008
    %v2010 = vadd.f32 %v2009, 1.0
    %v2011 = vrcp.pop %v2010
    %v2012 = vmul.f32 1.0, %v2011
    %v2013 = vtanh.pop %v2006
    %v2014 = vmul.f32 %v2012, %v1924
    %2016 = vrot.lane.b32.xlu0 %v2013, 64
    %v2017 = vpop.permute.xlu0 %2016
    %v2019 = vmul.f32 %v2012, %v2017
    %2021 = vrot.lane.b32.xlu0 %v2019, 32
    %v2022 = vpop.permute.xlu0 %2021
    %v2024 = vadd.f32 %v2014, %v2022
    %v2025 = vtanh.pop %v2024
    %2027 = vrot.lane.b32.xlu0 %v2025, 64
    %v2028 = vpop.permute.xlu0 %2027
    %v2030 = vmul.f32 %v2012, %v2028
    %v2031 = vld [vmem:[#allocation12] sm:$0xff]
    %v2032 = vld [vmem:[#allocation12 + $0x8] sm:$0xff]
    %v2033 = vld [vmem:[#allocation12 + $0x10] sm:$0xff]
    %v2034 = vld [vmem:[#allocation12 + $0x18] sm:$0xff]
    %v2035 = vld [vmem:[%s8] sm:$0x1]
    %v2037 = vlaneseq
    %v2038 = vshrl.u32 %v2037, 7
    %v2039 = vsub.s32 0, %v2038
    %v2040 = vrot.slane %v2035, %v2039
    %2043 = vrot.lane.b32.xlu0 %v2030, 32
    %v2044 = vpop.permute.xlu0 %2043
    %v2045 = vsel %vm266, %v2044, 0
    %2047 = vmatprep.subr.mxu0 0.0
    %2048 = vmatpush1.msra.mxu0 %v2031
    %2049 = vmatprep.subr.mxu0 0.0
    %2050 = vmatpush1.msra.mxu0 %v2032
    %2051 = vmatprep.subr.mxu0 0.0
    %2052 = vmatpush1.msra.mxu0 %v2033
    %2053 = vmatprep.subr.mxu0 0.0
    %2054 = vmatpush1.msra.mxu0 %v2034
    %2055 = vmatprep.subr.mxu0 0.0
    %2056 = vmatpush1.msra.mxu0 0.0
    %2057 = vmatprep.subr.mxu0 0.0
    %2058 = vmatpush1.msra.mxu0 0.0
    %2059 = vmatprep.subr.mxu0 0.0
    %2060 = vmatpush1.msra.mxu0 0.0
    %2061 = vmatprep.subr.mxu0 0.0
    %2062 = vmatpush1.msra.mxu0 0.0
    %2063 = vmatprep.subr.mxu0 0.0
    %2064 = vmatpush1.msra.mxu0 0.0
    %2065 = vmatprep.subr.mxu0 0.0
    %2066 = vmatpush1.msra.mxu0 0.0
    %2067 = vmatprep.subr.mxu0 0.0
    %2068 = vmatpush1.msra.mxu0 0.0
    %2069 = vmatprep.subr.mxu0 0.0
    %2070 = vmatpush1.msra.mxu0 0.0
    %2071 = vmatprep.subr.mxu0 0.0
    %2072 = vmatpush1.msra.mxu0 0.0
    %2073 = vmatprep.subr.mxu0 0.0
    %2074 = vmatpush1.msra.mxu0 0.0
    %2075 = vmatprep.subr.mxu0 0.0
    %2076 = vmatpush1.msra.mxu0 0.0
    %2077 = vmatprep.subr.mxu0 0.0
    %2078 = vmatpush1.msra.mxu0 0.0
    %2079 = vmatprep.subr.mxu0 0.0
    %2080 = vmatpush1.msra.mxu0 0.0
    %2081 = vmatprep.subr.mxu0 0.0
    %2082 = vmatpush1.msra.mxu0 0.0
    %2083 = vmatprep.subr.mxu0 0.0
    %2084 = vmatpush1.msra.mxu0 0.0
    %2085 = vmatprep.subr.mxu0 0.0
    %2086 = vmatpush1.msra.mxu0 0.0
    %2087 = vmatprep.subr.mxu0 0.0
    %2088 = vmatpush1.msra.mxu0 0.0
    %2089 = vmatprep.subr.mxu0 0.0
    %2090 = vmatpush1.msra.mxu0 0.0
    %2091 = vmatprep.subr.mxu0 0.0
    %2092 = vmatpush1.msra.mxu0 0.0
    %2093 = vmatprep.subr.mxu0 0.0
    %2094 = vmatpush1.msra.mxu0 0.0
    %2095 = vmatprep.subr.mxu0 0.0
    %2096 = vmatpush1.msra.mxu0 0.0
    %2097 = vmatprep.subr.mxu0 0.0
    %2098 = vmatpush1.msra.mxu0 0.0
    %2099 = vmatprep.subr.mxu0 0.0
    %2100 = vmatpush1.msra.mxu0 0.0
    %2101 = vmatprep.subr.mxu0 0.0
    %2102 = vmatpush1.msra.mxu0 0.0
    %2103 = vmatprep.subr.mxu0 0.0
    %2104 = vmatpush1.msra.mxu0 0.0
    %2105 = vmatprep.subr.mxu0 0.0
    %2106 = vmatpush1.msra.mxu0 0.0
    %2107 = vmatprep.subr.mxu0 0.0
    %2108 = vmatpush1.msra.mxu0 0.0
    %2109 = vmatprep.subr.mxu0 0.0
    %2110 = vmatpush1.msra.mxu0 0.0
    %2111 = vmatprep.mubr.f32.mxu0 0.0
    %2112 = vmatmul.mubr.f32.gmra.mrb[0].mxu0 %v2045
    %v2113 = vpop.f32.mrb[0].mxu0
    %v2114 = vadd.f32 %v2040, %v2113
    %v2115 = vpop.f32.mrb[0].mxu0
    %2116 = vdwg.mxu0
    %vm2117 = vcmask 408576
    %2118 = vst.msk [vmem:[#allocation14] sm:$0xff] %vm2117, %v2114
    // Predicated region
    $region62: #{tpu_custom_call.1} parent=1 // pred_check
      _
    $region63: #{tpu_custom_call.1} parent=1 // pred_check_branch
      %2120 = sbr.rel (0) target = $region65
    $region64: #{tpu_custom_call.1} parent=1 // pred_region
      %s2122 = ssub.s32 128, 128
      %2123 = vsyncadd [#allocation5], %s2122
      %s2125 = sshll.u32 [#allocation14], 4
      %s2126 = int_to_ptr.vmem [resolvable:$true] %s2125
      %2128 = dma.vmem_to_hbm [thread:$0]  %s2126, 128, %s9, [#allocation5]
    $region65: #{tpu_custom_call.1} parent=1 // pred_fallthru
      _
    // Predicated region
    $region66: #{tpu_custom_call.1} parent=1 // pred_check
      _
    $region67: #{tpu_custom_call.1} parent=1 // pred_check_branch
      %2130 = sbr.rel (0) target = $region69
    $region68: #{tpu_custom_call.1} parent=1 // pred_region
      %2131 = dma.done [#allocation5], 128
    $region69: #{tpu_custom_call.1} parent=1 // pred_fallthru
      _
    %2132 = vsyncpa [#allocation4], 1
    %2133 = vsyncpa [#allocation7], 1
    %2134 = vsyncpa [#allocation10], 1
    %2135 = vsyncpa [#allocation13], 1
    %2136 = vsyncpa [#allocation5], 1

</llo_original>
